<compile_context>
chip_gen: v7x
topology: tpu7x:2x2x1
jax: 0.10.0
libtpu: 0.0.40
codegen_flags: <defaults>
</compile_context>

<pallas_src>
import numpy as np
import jax
import jax.numpy as jnp
from jax import lax
from jax.experimental import pallas as pl
from jax.experimental.pallas import tpu as pltpu


# ----------------------------------------------------------------------------
# Kernel: 3 x (conv3x3 -> GroupNorm -> ReLU), residual after layer 2.
# Activation layout inside the kernel: (Cp, HW)  (channels on sublanes,
# flattened pixels on lanes; Cp = channels padded to a multiple of 8).
# ----------------------------------------------------------------------------
def _make_kernel(H, W, K, Cp, G, eps):
    HW = H * W
    pd = K // 2
    taps = [(kh - pd, kw - pd) for kh in range(K) for kw in range(K)]

    def kernel(x_ref, m_ref, w_ref, p_ref, gd_ref, gu_ref, o_ref):
        x = x_ref[0].astype(jnp.float32)                      # (Cp, HW)

        def im2col(a):                                        # a: (Cp, HW) f32
            pieces = []
            for t, (dh, dw) in enumerate(taps):               # static unroll (9)
                s = dh * W + dw
                shifted = a if s == 0 else pltpu.roll(a, (-s) % HW, axis=1)
                pieces.append(shifted * m_ref[t])             # (1,HW) mask bcast
            # pieces are (Cp, HW) with Cp a multiple of 8 -> aligned sublane concat
            return jnp.concatenate(pieces, axis=0)            # (KK*Cp, HW) f32

        def conv_gn_relu(a, l):
            # --- conv: single MXU matmul, bf16 operands, f32 accumulation -----
            xcol = im2col(a).astype(jnp.bfloat16)
            acc = jnp.dot(w_ref[l], xcol,
                          preferred_element_type=jnp.float32)  # (Cp, HW) f32
            prm = p_ref[l]                                     # (Cp, 3) f32
            acc = acc + prm[:, 0:1]                            # + bias

            # --- GroupNorm (biased var, PyTorch GN) ---------------------------
            ch_s = jnp.sum(acc, axis=1, keepdims=True)         # (Cp, 1)
            ch_q = jnp.sum(acc * acc, axis=1, keepdims=True)   # (Cp, 1)
            gd = gd_ref[l]                                     # (G, Cp), 1/n entries
            gu = gu_ref[l]                                     # (Cp, G), 1.0 entries
            mean_g = jnp.dot(gd, ch_s, preferred_element_type=jnp.float32)  # (G,1)
            ex2_g = jnp.dot(gd, ch_q, preferred_element_type=jnp.float32)   # (G,1)
            var_g = jnp.maximum(ex2_g - mean_g * mean_g, 0.0)  # clamp fp cancellation
            inv_g = lax.rsqrt(var_g + eps)
            mean_c = jnp.dot(gu, mean_g, preferred_element_type=jnp.float32)  # (Cp,1)
            inv_c = jnp.dot(gu, inv_g, preferred_element_type=jnp.float32)    # (Cp,1)
            scale = prm[:, 1:2] * inv_c                        # gamma * inv
            shift = prm[:, 2:3] - mean_c * scale               # beta - mean*gamma*inv
            return jnp.maximum(acc * scale + shift, 0.0)       # ReLU

        h = conv_gn_relu(x, 0)                                 # conv1 + norm1 + act
        h = conv_gn_relu(h, 1) + x                             # conv2 + norm2 + act + skip
        y = conv_gn_relu(h, 2)                                 # proj  + norm  + act
        o_ref[0] = y

    return kernel


# ----------------------------------------------------------------------------
# Wrapper-side packing helpers (pure layout glue, no compute duplication)
# ----------------------------------------------------------------------------
def _pack_weight(w_oihw, cp):
    """OIHW conv weight -> (cp, K*K*cp) matmul weight (tap-major, channel-minor)."""
    co, ci, K, _ = w_oihw.shape
    wt = jnp.transpose(w_oihw, (0, 2, 3, 1))                   # (Co, K, K, Ci)
    wt = jnp.pad(wt, ((0, cp - co), (0, 0), (0, 0), (0, cp - ci)))
    return wt.reshape(cp, K * K * cp)


def _pack_gn(bias, gamma, beta, cp):
    c = bias.shape[0]
    out = jnp.zeros((cp, 3), jnp.float32)
    return (out.at[:c, 0].set(bias.astype(jnp.float32))
               .at[:c, 1].set(gamma.astype(jnp.float32))
               .at[:c, 2].set(beta.astype(jnp.float32)))


def _build_masks(H, W, K):
    """(K*K, 1, H*W) f32 validity masks implementing the zero 'same' padding."""
    pd = K // 2
    ii, jj = np.meshgrid(np.arange(H), np.arange(W), indexing="ij")
    ms = []
    for kh in range(K):
        for kw in range(K):
            dh, dw = kh - pd, kw - pd
            m = ((ii + dh >= 0) & (ii + dh < H) & (jj + dw >= 0) & (jj + dw < W))
            ms.append(m.reshape(1, H * W).astype(np.float32))
    return jnp.asarray(np.stack(ms, axis=0))


def _group_maps(c_true, cp, groups, hw):
    """down: (G, cp) with 1/(hw*cpg) on member channels; up: (cp, G) with 1.0."""
    cpg = c_true // groups
    down = np.zeros((groups, cp), np.float32)
    up = np.zeros((cp, groups), np.float32)
    for g in range(groups):
        down[g, g * cpg:(g + 1) * cpg] = 1.0 / (hw * cpg)
        up[g * cpg:(g + 1) * cpg, g] = 1.0
    return down, up


# ----------------------------------------------------------------------------
# ResBlock forward (Pallas) and pure-JAX reference
# ----------------------------------------------------------------------------
def res_block_forward(x_nchw, p, *, groups=4, eps=1e-5):
    N, Cin, H, W = x_nchw.shape
    Cout, _, K, _ = p["wp"].shape
    assert Cin % groups == 0 and Cout % groups == 0
    HW, KK = H * W, K * K
    G = groups
    Cp = ((max(Cin, Cout) + 7) // 8) * 8                       # channel pad (sublane tile)

    # input: NCHW -> (N, Cp, HW), bf16 (pixels land on lanes: HW=256 lane-dense)
    x_flat = jnp.pad(x_nchw.reshape(N, Cin, HW), ((0, 0), (0, Cp - Cin), (0, 0)))
    x_flat = x_flat.astype(jnp.bfloat16)

    w_all = jnp.stack([_pack_weight(p["w1"], Cp),
                       _pack_weight(p["w2"], Cp),
                       _pack_weight(p["wp"], Cp)], axis=0).astype(jnp.bfloat16)
    gnp = jnp.stack([_pack_gn(p["b1"], p["g1"], p["bt1"], Cp),
                     _pack_gn(p["b2"], p["g2"], p["bt2"], Cp),
                     _pack_gn(p["bp"], p["gp"], p["btp"], Cp)], axis=0)
    d12, u12 = _group_maps(Cin, Cp, G, HW)                     # Block norms: C=Cin
    d3, u3 = _group_maps(Cout, Cp, G, HW)                      # proj norm:  C=Cout
    gdown = jnp.asarray(np.stack([d12, d12, d3], axis=0))      # (3, G, Cp)
    gup = jnp.asarray(np.stack([u12, u12, u3], axis=0))        # (3, Cp, G)
    masks = _build_masks(H, W, K)                              # (KK, 1, HW)

    kernel = _make_kernel(H, W, K, Cp, G, eps)

    flops = 2 * N * 3 * HW * (KK * Cp) * Cp
    bytes_accessed = (x_flat.size * 2 + w_all.size * 2 + masks.size * 4
                      + gnp.size * 4 + gdown.size * 4 + gup.size * 4
                      + N * Cp * HW * 4)

    out = pl.pallas_call(
        kernel,
        out_shape=jax.ShapeDtypeStruct((N, Cp, HW), jnp.float32),
        grid=(N,),
        in_specs=[
            pl.BlockSpec((1, Cp, HW), lambda n: (n, 0, 0)),        # x (per batch elem)
            pl.BlockSpec((KK, 1, HW), lambda n: (0, 0, 0)),        # padding masks
            pl.BlockSpec((3, Cp, KK * Cp), lambda n: (0, 0, 0)),   # weights (resident)
            pl.BlockSpec((3, Cp, 3), lambda n: (0, 0, 0)),         # bias/gamma/beta
            pl.BlockSpec((3, G, Cp), lambda n: (0, 0, 0)),         # group reduce maps
            pl.BlockSpec((3, Cp, G), lambda n: (0, 0, 0)),         # group bcast maps
        ],
        out_specs=pl.BlockSpec((1, Cp, HW), lambda n: (n, 0, 0)),  # lane-dense (HW)
        compiler_params=pltpu.CompilerParams(
            dimension_semantics=("parallel",)),
        cost_estimate=pl.CostEstimate(flops=flops,
                                      transcendentals=N * 3 * G,
                                      bytes_accessed=bytes_accessed),
    )(x_flat, masks, w_all, gnp, gdown, gup)

    # (N, Cp, HW) -> NCHW, dropping pad channels (pad channels are exactly zero).
    return out[:, :Cout, :].reshape(N, Cout, H, W)


def _ref_conv(x, w_oihw, b):
    y = lax.conv_general_dilated(
        x, w_oihw, window_strides=(1, 1), padding="SAME",
        dimension_numbers=("NCHW", "OIHW", "NCHW"),
        precision=lax.Precision.HIGHEST)
    return y + b.reshape(1, -1, 1, 1)


def _ref_gn(x, gamma, beta, groups=4, eps=1e-5):
    N, C, H, W = x.shape
    xg = x.reshape(N, groups, C // groups, H, W)
    mean = xg.mean(axis=(2, 3, 4), keepdims=True)
    var = ((xg - mean) ** 2).mean(axis=(2, 3, 4), keepdims=True)
    xn = ((xg - mean) * lax.rsqrt(var + eps)).reshape(N, C, H, W)
    return xn * gamma.reshape(1, -1, 1, 1) + beta.reshape(1, -1, 1, 1)


def res_block_reference(x, p):
    h = jax.nn.relu(_ref_gn(_ref_conv(x, p["w1"], p["b1"]), p["g1"], p["bt1"]))
    h = jax.nn.relu(_ref_gn(_ref_conv(h, p["w2"], p["b2"]), p["g2"], p["bt2"]))
    h = h + x
    y = jax.nn.relu(_ref_gn(_ref_conv(h, p["wp"], p["bp"]), p["gp"], p["btp"]))
    return y


# ----------------------------------------------------------------------------
if __name__ == "__main__":
    N, C_IN, C_OUT, H, W, K = 2, 4, 8, 16, 16, 3
    key = jax.random.PRNGKey(0)
    keys = jax.random.split(key, 13)

    def conv_params(kw_key, kb_key, ci, co):
        # PyTorch Conv2d weight layout: OIHW
        w = 0.2 * jax.random.normal(kw_key, (co, ci, K, K), jnp.float32)
        b = 0.1 * jax.random.normal(kb_key, (co,), jnp.float32)
        return w, b

    def gn_params(kg, kb, c):
        gamma = 1.0 + 0.1 * jax.random.normal(kg, (c,), jnp.float32)
        beta = 0.1 * jax.random.normal(kb, (c,), jnp.float32)
        return gamma, beta

    w1, b1 = conv_params(keys[0], keys[1], C_IN, C_IN)
    g1, bt1 = gn_params(keys[2], keys[3], C_IN)
    w2, b2 = conv_params(keys[4], keys[5], C_IN, C_IN)
    g2, bt2 = gn_params(keys[6], keys[7], C_IN)
    wp, bp = conv_params(keys[8], keys[9], C_IN, C_OUT)
    gp, btp = gn_params(keys[10], keys[11], C_OUT)

    params = dict(w1=w1, b1=b1, g1=g1, bt1=bt1,
                  w2=w2, b2=b2, g2=g2, bt2=bt2,
                  wp=wp, bp=bp, gp=gp, btp=btp)

    x = jax.random.normal(keys[12], (N, C_IN, H, W), jnp.float32)

    y = jax.block_until_ready(jax.jit(res_block_forward)(x, params))
    y_ref = res_block_reference(x, params)

    assert y.shape == (N, C_OUT, H, W), y.shape
    max_err = float(jnp.max(jnp.abs(y - y_ref)))
    # bf16 MXU operands (per perf review) -> tolerance loosened vs. the pure-f32
    # reference; errors compound over three conv+GN layers.
    assert jnp.allclose(y, y_ref, atol=5e-2, rtol=5e-2), max_err
    print("KERNEL_OK")
</pallas_src>

<mosaic_0001>
module attributes {stable_mosaic.version = 11 : i64} {
  func.func @kernel(%arg0: i32, %arg1: memref<1x8x256xbf16, #tpu.memory_space<vmem>>, %arg2: memref<9x1x256xf32, #tpu.memory_space<vmem>>, %arg3: memref<3x8x72xbf16, #tpu.memory_space<vmem>>, %arg4: memref<3x8x3xf32, #tpu.memory_space<vmem>>, %arg5: memref<3x4x8xf32, #tpu.memory_space<vmem>>, %arg6: memref<3x8x4xf32, #tpu.memory_space<vmem>>, %arg7: memref<1x8x256xf32, #tpu.memory_space<vmem>>) attributes {dimension_semantics = [#tpu.dimension_semantics<parallel>], iteration_bounds = array<i64: 2>, scalar_prefetch = 0 : i64, scratch_operands = 0 : i64, tpu.core_type = #tpu.core_type<tc>, window_params = [{transform_indices = @transform_0, window_bounds = array<i64: 1, 8, 256>}, {pipeline_mode = #tpu.pipeline_mode<synchronous>, transform_indices = @transform_1, window_bounds = array<i64: 9, 1, 256>}, {pipeline_mode = #tpu.pipeline_mode<synchronous>, transform_indices = @transform_2, window_bounds = array<i64: 3, 8, 72>}, {pipeline_mode = #tpu.pipeline_mode<synchronous>, transform_indices = @transform_3, window_bounds = array<i64: 3, 8, 3>}, {pipeline_mode = #tpu.pipeline_mode<synchronous>, transform_indices = @transform_4, window_bounds = array<i64: 3, 4, 8>}, {pipeline_mode = #tpu.pipeline_mode<synchronous>, transform_indices = @transform_5, window_bounds = array<i64: 3, 8, 4>}, {transform_indices = @transform_6, window_bounds = array<i64: 1, 8, 256>}]} {
    %c0 = arith.constant 0 : index
    %c0_0 = arith.constant 0 : index
    %c0_1 = arith.constant 0 : index
    %0 = vector.load %arg1[%c0, %c0_0, %c0_1] : memref<1x8x256xbf16, #tpu.memory_space<vmem>>, vector<1x8x256xbf16>
    %1 = vector.shape_cast %0 : vector<1x8x256xbf16> to vector<8x256xbf16>
    %2 = arith.extf %1 : vector<8x256xbf16> to vector<8x256xf32>
    %c17_i32 = arith.constant 17 : i32
    %3 = tpu.dynamic_rotate %2 by %c17_i32 dim 1 : vector<8x256xf32>, i32 -> vector<8x256xf32>
    %c0_2 = arith.constant 0 : index
    %c0_3 = arith.constant 0 : index
    %c0_4 = arith.constant 0 : index
    %4 = vector.load %arg2[%c0_2, %c0_3, %c0_4] : memref<9x1x256xf32, #tpu.memory_space<vmem>>, vector<1x1x256xf32>
    %5 = vector.shape_cast %4 : vector<1x1x256xf32> to vector<1x256xf32>
    %6 = vector.broadcast %5 : vector<1x256xf32> to vector<8x256xf32>
    %7 = arith.mulf %3, %6 : vector<8x256xf32>
    %c16_i32 = arith.constant 16 : i32
    %8 = tpu.dynamic_rotate %2 by %c16_i32 dim 1 : vector<8x256xf32>, i32 -> vector<8x256xf32>
    %c1 = arith.constant 1 : index
    %c0_5 = arith.constant 0 : index
    %c0_6 = arith.constant 0 : index
    %9 = vector.load %arg2[%c1, %c0_5, %c0_6] : memref<9x1x256xf32, #tpu.memory_space<vmem>>, vector<1x1x256xf32>
    %10 = vector.shape_cast %9 : vector<1x1x256xf32> to vector<1x256xf32>
    %11 = vector.broadcast %10 : vector<1x256xf32> to vector<8x256xf32>
    %12 = arith.mulf %8, %11 : vector<8x256xf32>
    %c15_i32 = arith.constant 15 : i32
    %13 = tpu.dynamic_rotate %2 by %c15_i32 dim 1 : vector<8x256xf32>, i32 -> vector<8x256xf32>
    %c2 = arith.constant 2 : index
    %c0_7 = arith.constant 0 : index
    %c0_8 = arith.constant 0 : index
    %14 = vector.load %arg2[%c2, %c0_7, %c0_8] : memref<9x1x256xf32, #tpu.memory_space<vmem>>, vector<1x1x256xf32>
    %15 = vector.shape_cast %14 : vector<1x1x256xf32> to vector<1x256xf32>
    %16 = vector.broadcast %15 : vector<1x256xf32> to vector<8x256xf32>
    %17 = arith.mulf %13, %16 : vector<8x256xf32>
    %c1_i32 = arith.constant 1 : i32
    %18 = tpu.dynamic_rotate %2 by %c1_i32 dim 1 : vector<8x256xf32>, i32 -> vector<8x256xf32>
    %c3 = arith.constant 3 : index
    %c0_9 = arith.constant 0 : index
    %c0_10 = arith.constant 0 : index
    %19 = vector.load %arg2[%c3, %c0_9, %c0_10] : memref<9x1x256xf32, #tpu.memory_space<vmem>>, vector<1x1x256xf32>
    %20 = vector.shape_cast %19 : vector<1x1x256xf32> to vector<1x256xf32>
    %21 = vector.broadcast %20 : vector<1x256xf32> to vector<8x256xf32>
    %22 = arith.mulf %18, %21 : vector<8x256xf32>
    %c4 = arith.constant 4 : index
    %c0_11 = arith.constant 0 : index
    %c0_12 = arith.constant 0 : index
    %23 = vector.load %arg2[%c4, %c0_11, %c0_12] : memref<9x1x256xf32, #tpu.memory_space<vmem>>, vector<1x1x256xf32>
    %24 = vector.shape_cast %23 : vector<1x1x256xf32> to vector<1x256xf32>
    %25 = vector.broadcast %24 : vector<1x256xf32> to vector<8x256xf32>
    %26 = arith.mulf %2, %25 : vector<8x256xf32>
    %c255_i32 = arith.constant 255 : i32
    %27 = tpu.dynamic_rotate %2 by %c255_i32 dim 1 : vector<8x256xf32>, i32 -> vector<8x256xf32>
    %c5 = arith.constant 5 : index
    %c0_13 = arith.constant 0 : index
    %c0_14 = arith.constant 0 : index
    %28 = vector.load %arg2[%c5, %c0_13, %c0_14] : memref<9x1x256xf32, #tpu.memory_space<vmem>>, vector<1x1x256xf32>
    %29 = vector.shape_cast %28 : vector<1x1x256xf32> to vector<1x256xf32>
    %30 = vector.broadcast %29 : vector<1x256xf32> to vector<8x256xf32>
    %31 = arith.mulf %27, %30 : vector<8x256xf32>
    %c241_i32 = arith.constant 241 : i32
    %32 = tpu.dynamic_rotate %2 by %c241_i32 dim 1 : vector<8x256xf32>, i32 -> vector<8x256xf32>
    %c6 = arith.constant 6 : index
    %c0_15 = arith.constant 0 : index
    %c0_16 = arith.constant 0 : index
    %33 = vector.load %arg2[%c6, %c0_15, %c0_16] : memref<9x1x256xf32, #tpu.memory_space<vmem>>, vector<1x1x256xf32>
    %34 = vector.shape_cast %33 : vector<1x1x256xf32> to vector<1x256xf32>
    %35 = vector.broadcast %34 : vector<1x256xf32> to vector<8x256xf32>
    %36 = arith.mulf %32, %35 : vector<8x256xf32>
    %c240_i32 = arith.constant 240 : i32
    %37 = tpu.dynamic_rotate %2 by %c240_i32 dim 1 : vector<8x256xf32>, i32 -> vector<8x256xf32>
    %c7 = arith.constant 7 : index
    %c0_17 = arith.constant 0 : index
    %c0_18 = arith.constant 0 : index
    %38 = vector.load %arg2[%c7, %c0_17, %c0_18] : memref<9x1x256xf32, #tpu.memory_space<vmem>>, vector<1x1x256xf32>
    %39 = vector.shape_cast %38 : vector<1x1x256xf32> to vector<1x256xf32>
    %40 = vector.broadcast %39 : vector<1x256xf32> to vector<8x256xf32>
    %41 = arith.mulf %37, %40 : vector<8x256xf32>
    %c239_i32 = arith.constant 239 : i32
    %42 = tpu.dynamic_rotate %2 by %c239_i32 dim 1 : vector<8x256xf32>, i32 -> vector<8x256xf32>
    %c8 = arith.constant 8 : index
    %c0_19 = arith.constant 0 : index
    %c0_20 = arith.constant 0 : index
    %43 = vector.load %arg2[%c8, %c0_19, %c0_20] : memref<9x1x256xf32, #tpu.memory_space<vmem>>, vector<1x1x256xf32>
    %44 = vector.shape_cast %43 : vector<1x1x256xf32> to vector<1x256xf32>
    %45 = vector.broadcast %44 : vector<1x256xf32> to vector<8x256xf32>
    %46 = arith.mulf %42, %45 : vector<8x256xf32>
    %47 = tpu.concatenate %7, %12, %17, %22, %26, %31, %36, %41, %46 in 0 : vector<8x256xf32>, vector<8x256xf32>, vector<8x256xf32>, vector<8x256xf32>, vector<8x256xf32>, vector<8x256xf32>, vector<8x256xf32>, vector<8x256xf32>, vector<8x256xf32> -> vector<72x256xf32>
    %48 = arith.truncf %47 : vector<72x256xf32> to vector<72x256xbf16>
    %c0_21 = arith.constant 0 : index
    %c0_22 = arith.constant 0 : index
    %c0_23 = arith.constant 0 : index
    %49 = vector.load %arg3[%c0_21, %c0_22, %c0_23] : memref<3x8x72xbf16, #tpu.memory_space<vmem>>, vector<1x8x72xbf16>
    %50 = vector.shape_cast %49 : vector<1x8x72xbf16> to vector<8x72xbf16>
    %cst = arith.constant dense<0.000000e+00> : vector<8x256xf32>
    %51 = tpu.matmul %50, %48, %cst {dimension_numbers = #tpu.dot_dimension_numbers<[1], [0], [0], [1], [0, 0, 1, 1], [], []>} : vector<8x72xbf16>, vector<72x256xbf16>, vector<8x256xf32> -> vector<8x256xf32>
    %c0_24 = arith.constant 0 : index
    %c0_25 = arith.constant 0 : index
    %c0_26 = arith.constant 0 : index
    %52 = vector.load %arg4[%c0_24, %c0_25, %c0_26] : memref<3x8x3xf32, #tpu.memory_space<vmem>>, vector<1x8x3xf32>
    %53 = vector.shape_cast %52 : vector<1x8x3xf32> to vector<8x3xf32>
    %54 = vector.extract_strided_slice %53 {offsets = [0, 0], sizes = [8, 1], strides = [1, 1]} : vector<8x3xf32> to vector<8x1xf32>
    %55 = vector.broadcast %54 : vector<8x1xf32> to vector<8x256xf32>
    %56 = arith.addf %51, %55 : vector<8x256xf32>
    %cst_27 = arith.constant dense<0.000000e+00> : vector<8xf32>
    %57 = vector.multi_reduction <add>, %56, %cst_27 [1] : vector<8x256xf32> to vector<8xf32>
    %58 = vector.shape_cast %57 : vector<8xf32> to vector<8x1xf32>
    %59 = arith.mulf %56, %56 : vector<8x256xf32>
    %cst_28 = arith.constant dense<0.000000e+00> : vector<8xf32>
    %60 = vector.multi_reduction <add>, %59, %cst_28 [1] : vector<8x256xf32> to vector<8xf32>
    %61 = vector.shape_cast %60 : vector<8xf32> to vector<8x1xf32>
    %c0_29 = arith.constant 0 : index
    %c0_30 = arith.constant 0 : index
    %c0_31 = arith.constant 0 : index
    %62 = vector.load %arg5[%c0_29, %c0_30, %c0_31] : memref<3x4x8xf32, #tpu.memory_space<vmem>>, vector<1x4x8xf32>
    %63 = vector.shape_cast %62 : vector<1x4x8xf32> to vector<4x8xf32>
    %c0_32 = arith.constant 0 : index
    %c0_33 = arith.constant 0 : index
    %c0_34 = arith.constant 0 : index
    %64 = vector.load %arg6[%c0_32, %c0_33, %c0_34] : memref<3x8x4xf32, #tpu.memory_space<vmem>>, vector<1x8x4xf32>
    %65 = vector.shape_cast %64 : vector<1x8x4xf32> to vector<8x4xf32>
    %cst_35 = arith.constant dense<0.000000e+00> : vector<4x1xf32>
    %66 = tpu.matmul %63, %58, %cst_35 {dimension_numbers = #tpu.dot_dimension_numbers<[1], [0], [0], [1], [0, 0, 1, 1], [], []>} : vector<4x8xf32>, vector<8x1xf32>, vector<4x1xf32> -> vector<4x1xf32>
    %cst_36 = arith.constant dense<0.000000e+00> : vector<4x1xf32>
    %67 = tpu.matmul %63, %61, %cst_36 {dimension_numbers = #tpu.dot_dimension_numbers<[1], [0], [0], [1], [0, 0, 1, 1], [], []>} : vector<4x8xf32>, vector<8x1xf32>, vector<4x1xf32> -> vector<4x1xf32>
    %68 = arith.mulf %66, %66 : vector<4x1xf32>
    %69 = arith.subf %67, %68 : vector<4x1xf32>
    %cst_37 = arith.constant 0.000000e+00 : f32
    %70 = vector.broadcast %cst_37 : f32 to vector<4x1xf32>
    %71 = arith.maximumf %69, %70 : vector<4x1xf32>
    %cst_38 = arith.constant 9.99999974E-6 : f32
    %72 = vector.broadcast %cst_38 : f32 to vector<4x1xf32>
    %73 = arith.addf %71, %72 : vector<4x1xf32>
    %74 = math.rsqrt %73 : vector<4x1xf32>
    %cst_39 = arith.constant dense<0.000000e+00> : vector<8x1xf32>
    %75 = tpu.matmul %65, %66, %cst_39 {dimension_numbers = #tpu.dot_dimension_numbers<[1], [0], [0], [1], [0, 0, 1, 1], [], []>} : vector<8x4xf32>, vector<4x1xf32>, vector<8x1xf32> -> vector<8x1xf32>
    %cst_40 = arith.constant dense<0.000000e+00> : vector<8x1xf32>
    %76 = tpu.matmul %65, %74, %cst_40 {dimension_numbers = #tpu.dot_dimension_numbers<[1], [0], [0], [1], [0, 0, 1, 1], [], []>} : vector<8x4xf32>, vector<4x1xf32>, vector<8x1xf32> -> vector<8x1xf32>
    %77 = vector.extract_strided_slice %53 {offsets = [0, 1], sizes = [8, 1], strides = [1, 1]} : vector<8x3xf32> to vector<8x1xf32>
    %78 = arith.mulf %77, %76 : vector<8x1xf32>
    %79 = vector.extract_strided_slice %53 {offsets = [0, 2], sizes = [8, 1], strides = [1, 1]} : vector<8x3xf32> to vector<8x1xf32>
    %80 = arith.mulf %75, %78 : vector<8x1xf32>
    %81 = arith.subf %79, %80 : vector<8x1xf32>
    %82 = vector.broadcast %78 : vector<8x1xf32> to vector<8x256xf32>
    %83 = arith.mulf %56, %82 : vector<8x256xf32>
    %84 = vector.broadcast %81 : vector<8x1xf32> to vector<8x256xf32>
    %85 = arith.addf %83, %84 : vector<8x256xf32>
    %cst_41 = arith.constant 0.000000e+00 : f32
    %86 = vector.broadcast %cst_41 : f32 to vector<8x256xf32>
    %87 = arith.maximumf %85, %86 : vector<8x256xf32>
    %c17_i32_42 = arith.constant 17 : i32
    %88 = tpu.dynamic_rotate %87 by %c17_i32_42 dim 1 : vector<8x256xf32>, i32 -> vector<8x256xf32>
    %c0_43 = arith.constant 0 : index
    %c0_44 = arith.constant 0 : index
    %c0_45 = arith.constant 0 : index
    %89 = vector.load %arg2[%c0_43, %c0_44, %c0_45] : memref<9x1x256xf32, #tpu.memory_space<vmem>>, vector<1x1x256xf32>
    %90 = vector.shape_cast %89 : vector<1x1x256xf32> to vector<1x256xf32>
    %91 = vector.broadcast %90 : vector<1x256xf32> to vector<8x256xf32>
    %92 = arith.mulf %88, %91 : vector<8x256xf32>
    %c16_i32_46 = arith.constant 16 : i32
    %93 = tpu.dynamic_rotate %87 by %c16_i32_46 dim 1 : vector<8x256xf32>, i32 -> vector<8x256xf32>
    %c1_47 = arith.constant 1 : index
    %c0_48 = arith.constant 0 : index
    %c0_49 = arith.constant 0 : index
    %94 = vector.load %arg2[%c1_47, %c0_48, %c0_49] : memref<9x1x256xf32, #tpu.memory_space<vmem>>, vector<1x1x256xf32>
    %95 = vector.shape_cast %94 : vector<1x1x256xf32> to vector<1x256xf32>
    %96 = vector.broadcast %95 : vector<1x256xf32> to vector<8x256xf32>
    %97 = arith.mulf %93, %96 : vector<8x256xf32>
    %c15_i32_50 = arith.constant 15 : i32
    %98 = tpu.dynamic_rotate %87 by %c15_i32_50 dim 1 : vector<8x256xf32>, i32 -> vector<8x256xf32>
    %c2_51 = arith.constant 2 : index
    %c0_52 = arith.constant 0 : index
    %c0_53 = arith.constant 0 : index
    %99 = vector.load %arg2[%c2_51, %c0_52, %c0_53] : memref<9x1x256xf32, #tpu.memory_space<vmem>>, vector<1x1x256xf32>
    %100 = vector.shape_cast %99 : vector<1x1x256xf32> to vector<1x256xf32>
    %101 = vector.broadcast %100 : vector<1x256xf32> to vector<8x256xf32>
    %102 = arith.mulf %98, %101 : vector<8x256xf32>
    %c1_i32_54 = arith.constant 1 : i32
    %103 = tpu.dynamic_rotate %87 by %c1_i32_54 dim 1 : vector<8x256xf32>, i32 -> vector<8x256xf32>
    %c3_55 = arith.constant 3 : index
    %c0_56 = arith.constant 0 : index
    %c0_57 = arith.constant 0 : index
    %104 = vector.load %arg2[%c3_55, %c0_56, %c0_57] : memref<9x1x256xf32, #tpu.memory_space<vmem>>, vector<1x1x256xf32>
    %105 = vector.shape_cast %104 : vector<1x1x256xf32> to vector<1x256xf32>
    %106 = vector.broadcast %105 : vector<1x256xf32> to vector<8x256xf32>
    %107 = arith.mulf %103, %106 : vector<8x256xf32>
    %c4_58 = arith.constant 4 : index
    %c0_59 = arith.constant 0 : index
    %c0_60 = arith.constant 0 : index
    %108 = vector.load %arg2[%c4_58, %c0_59, %c0_60] : memref<9x1x256xf32, #tpu.memory_space<vmem>>, vector<1x1x256xf32>
    %109 = vector.shape_cast %108 : vector<1x1x256xf32> to vector<1x256xf32>
    %110 = vector.broadcast %109 : vector<1x256xf32> to vector<8x256xf32>
    %111 = arith.mulf %87, %110 : vector<8x256xf32>
    %c255_i32_61 = arith.constant 255 : i32
    %112 = tpu.dynamic_rotate %87 by %c255_i32_61 dim 1 : vector<8x256xf32>, i32 -> vector<8x256xf32>
    %c5_62 = arith.constant 5 : index
    %c0_63 = arith.constant 0 : index
    %c0_64 = arith.constant 0 : index
    %113 = vector.load %arg2[%c5_62, %c0_63, %c0_64] : memref<9x1x256xf32, #tpu.memory_space<vmem>>, vector<1x1x256xf32>
    %114 = vector.shape_cast %113 : vector<1x1x256xf32> to vector<1x256xf32>
    %115 = vector.broadcast %114 : vector<1x256xf32> to vector<8x256xf32>
    %116 = arith.mulf %112, %115 : vector<8x256xf32>
    %c241_i32_65 = arith.constant 241 : i32
    %117 = tpu.dynamic_rotate %87 by %c241_i32_65 dim 1 : vector<8x256xf32>, i32 -> vector<8x256xf32>
    %c6_66 = arith.constant 6 : index
    %c0_67 = arith.constant 0 : index
    %c0_68 = arith.constant 0 : index
    %118 = vector.load %arg2[%c6_66, %c0_67, %c0_68] : memref<9x1x256xf32, #tpu.memory_space<vmem>>, vector<1x1x256xf32>
    %119 = vector.shape_cast %118 : vector<1x1x256xf32> to vector<1x256xf32>
    %120 = vector.broadcast %119 : vector<1x256xf32> to vector<8x256xf32>
    %121 = arith.mulf %117, %120 : vector<8x256xf32>
    %c240_i32_69 = arith.constant 240 : i32
    %122 = tpu.dynamic_rotate %87 by %c240_i32_69 dim 1 : vector<8x256xf32>, i32 -> vector<8x256xf32>
    %c7_70 = arith.constant 7 : index
    %c0_71 = arith.constant 0 : index
    %c0_72 = arith.constant 0 : index
    %123 = vector.load %arg2[%c7_70, %c0_71, %c0_72] : memref<9x1x256xf32, #tpu.memory_space<vmem>>, vector<1x1x256xf32>
    %124 = vector.shape_cast %123 : vector<1x1x256xf32> to vector<1x256xf32>
    %125 = vector.broadcast %124 : vector<1x256xf32> to vector<8x256xf32>
    %126 = arith.mulf %122, %125 : vector<8x256xf32>
    %c239_i32_73 = arith.constant 239 : i32
    %127 = tpu.dynamic_rotate %87 by %c239_i32_73 dim 1 : vector<8x256xf32>, i32 -> vector<8x256xf32>
    %c8_74 = arith.constant 8 : index
    %c0_75 = arith.constant 0 : index
    %c0_76 = arith.constant 0 : index
    %128 = vector.load %arg2[%c8_74, %c0_75, %c0_76] : memref<9x1x256xf32, #tpu.memory_space<vmem>>, vector<1x1x256xf32>
    %129 = vector.shape_cast %128 : vector<1x1x256xf32> to vector<1x256xf32>
    %130 = vector.broadcast %129 : vector<1x256xf32> to vector<8x256xf32>
    %131 = arith.mulf %127, %130 : vector<8x256xf32>
    %132 = tpu.concatenate %92, %97, %102, %107, %111, %116, %121, %126, %131 in 0 : vector<8x256xf32>, vector<8x256xf32>, vector<8x256xf32>, vector<8x256xf32>, vector<8x256xf32>, vector<8x256xf32>, vector<8x256xf32>, vector<8x256xf32>, vector<8x256xf32> -> vector<72x256xf32>
    %133 = arith.truncf %132 : vector<72x256xf32> to vector<72x256xbf16>
    %c1_77 = arith.constant 1 : index
    %c0_78 = arith.constant 0 : index
    %c0_79 = arith.constant 0 : index
    %134 = vector.load %arg3[%c1_77, %c0_78, %c0_79] : memref<3x8x72xbf16, #tpu.memory_space<vmem>>, vector<1x8x72xbf16>
    %135 = vector.shape_cast %134 : vector<1x8x72xbf16> to vector<8x72xbf16>
    %cst_80 = arith.constant dense<0.000000e+00> : vector<8x256xf32>
    %136 = tpu.matmul %135, %133, %cst_80 {dimension_numbers = #tpu.dot_dimension_numbers<[1], [0], [0], [1], [0, 0, 1, 1], [], []>} : vector<8x72xbf16>, vector<72x256xbf16>, vector<8x256xf32> -> vector<8x256xf32>
    %c1_81 = arith.constant 1 : index
    %c0_82 = arith.constant 0 : index
    %c0_83 = arith.constant 0 : index
    %137 = vector.load %arg4[%c1_81, %c0_82, %c0_83] : memref<3x8x3xf32, #tpu.memory_space<vmem>>, vector<1x8x3xf32>
    %138 = vector.shape_cast %137 : vector<1x8x3xf32> to vector<8x3xf32>
    %139 = vector.extract_strided_slice %138 {offsets = [0, 0], sizes = [8, 1], strides = [1, 1]} : vector<8x3xf32> to vector<8x1xf32>
    %140 = vector.broadcast %139 : vector<8x1xf32> to vector<8x256xf32>
    %141 = arith.addf %136, %140 : vector<8x256xf32>
    %cst_84 = arith.constant dense<0.000000e+00> : vector<8xf32>
    %142 = vector.multi_reduction <add>, %141, %cst_84 [1] : vector<8x256xf32> to vector<8xf32>
    %143 = vector.shape_cast %142 : vector<8xf32> to vector<8x1xf32>
    %144 = arith.mulf %141, %141 : vector<8x256xf32>
    %cst_85 = arith.constant dense<0.000000e+00> : vector<8xf32>
    %145 = vector.multi_reduction <add>, %144, %cst_85 [1] : vector<8x256xf32> to vector<8xf32>
    %146 = vector.shape_cast %145 : vector<8xf32> to vector<8x1xf32>
    %c1_86 = arith.constant 1 : index
    %c0_87 = arith.constant 0 : index
    %c0_88 = arith.constant 0 : index
    %147 = vector.load %arg5[%c1_86, %c0_87, %c0_88] : memref<3x4x8xf32, #tpu.memory_space<vmem>>, vector<1x4x8xf32>
    %148 = vector.shape_cast %147 : vector<1x4x8xf32> to vector<4x8xf32>
    %c1_89 = arith.constant 1 : index
    %c0_90 = arith.constant 0 : index
    %c0_91 = arith.constant 0 : index
    %149 = vector.load %arg6[%c1_89, %c0_90, %c0_91] : memref<3x8x4xf32, #tpu.memory_space<vmem>>, vector<1x8x4xf32>
    %150 = vector.shape_cast %149 : vector<1x8x4xf32> to vector<8x4xf32>
    %cst_92 = arith.constant dense<0.000000e+00> : vector<4x1xf32>
    %151 = tpu.matmul %148, %143, %cst_92 {dimension_numbers = #tpu.dot_dimension_numbers<[1], [0], [0], [1], [0, 0, 1, 1], [], []>} : vector<4x8xf32>, vector<8x1xf32>, vector<4x1xf32> -> vector<4x1xf32>
    %cst_93 = arith.constant dense<0.000000e+00> : vector<4x1xf32>
    %152 = tpu.matmul %148, %146, %cst_93 {dimension_numbers = #tpu.dot_dimension_numbers<[1], [0], [0], [1], [0, 0, 1, 1], [], []>} : vector<4x8xf32>, vector<8x1xf32>, vector<4x1xf32> -> vector<4x1xf32>
    %153 = arith.mulf %151, %151 : vector<4x1xf32>
    %154 = arith.subf %152, %153 : vector<4x1xf32>
    %cst_94 = arith.constant 0.000000e+00 : f32
    %155 = vector.broadcast %cst_94 : f32 to vector<4x1xf32>
    %156 = arith.maximumf %154, %155 : vector<4x1xf32>
    %cst_95 = arith.constant 9.99999974E-6 : f32
    %157 = vector.broadcast %cst_95 : f32 to vector<4x1xf32>
    %158 = arith.addf %156, %157 : vector<4x1xf32>
    %159 = math.rsqrt %158 : vector<4x1xf32>
    %cst_96 = arith.constant dense<0.000000e+00> : vector<8x1xf32>
    %160 = tpu.matmul %150, %151, %cst_96 {dimension_numbers = #tpu.dot_dimension_numbers<[1], [0], [0], [1], [0, 0, 1, 1], [], []>} : vector<8x4xf32>, vector<4x1xf32>, vector<8x1xf32> -> vector<8x1xf32>
    %cst_97 = arith.constant dense<0.000000e+00> : vector<8x1xf32>
    %161 = tpu.matmul %150, %159, %cst_97 {dimension_numbers = #tpu.dot_dimension_numbers<[1], [0], [0], [1], [0, 0, 1, 1], [], []>} : vector<8x4xf32>, vector<4x1xf32>, vector<8x1xf32> -> vector<8x1xf32>
    %162 = vector.extract_strided_slice %138 {offsets = [0, 1], sizes = [8, 1], strides = [1, 1]} : vector<8x3xf32> to vector<8x1xf32>
    %163 = arith.mulf %162, %161 : vector<8x1xf32>
    %164 = vector.extract_strided_slice %138 {offsets = [0, 2], sizes = [8, 1], strides = [1, 1]} : vector<8x3xf32> to vector<8x1xf32>
    %165 = arith.mulf %160, %163 : vector<8x1xf32>
    %166 = arith.subf %164, %165 : vector<8x1xf32>
    %167 = vector.broadcast %163 : vector<8x1xf32> to vector<8x256xf32>
    %168 = arith.mulf %141, %167 : vector<8x256xf32>
    %169 = vector.broadcast %166 : vector<8x1xf32> to vector<8x256xf32>
    %170 = arith.addf %168, %169 : vector<8x256xf32>
    %cst_98 = arith.constant 0.000000e+00 : f32
    %171 = vector.broadcast %cst_98 : f32 to vector<8x256xf32>
    %172 = arith.maximumf %170, %171 : vector<8x256xf32>
    %173 = arith.addf %172, %2 : vector<8x256xf32>
    %c17_i32_99 = arith.constant 17 : i32
    %174 = tpu.dynamic_rotate %173 by %c17_i32_99 dim 1 : vector<8x256xf32>, i32 -> vector<8x256xf32>
    %c0_100 = arith.constant 0 : index
    %c0_101 = arith.constant 0 : index
    %c0_102 = arith.constant 0 : index
    %175 = vector.load %arg2[%c0_100, %c0_101, %c0_102] : memref<9x1x256xf32, #tpu.memory_space<vmem>>, vector<1x1x256xf32>
    %176 = vector.shape_cast %175 : vector<1x1x256xf32> to vector<1x256xf32>
    %177 = vector.broadcast %176 : vector<1x256xf32> to vector<8x256xf32>
    %178 = arith.mulf %174, %177 : vector<8x256xf32>
    %c16_i32_103 = arith.constant 16 : i32
    %179 = tpu.dynamic_rotate %173 by %c16_i32_103 dim 1 : vector<8x256xf32>, i32 -> vector<8x256xf32>
    %c1_104 = arith.constant 1 : index
    %c0_105 = arith.constant 0 : index
    %c0_106 = arith.constant 0 : index
    %180 = vector.load %arg2[%c1_104, %c0_105, %c0_106] : memref<9x1x256xf32, #tpu.memory_space<vmem>>, vector<1x1x256xf32>
    %181 = vector.shape_cast %180 : vector<1x1x256xf32> to vector<1x256xf32>
    %182 = vector.broadcast %181 : vector<1x256xf32> to vector<8x256xf32>
    %183 = arith.mulf %179, %182 : vector<8x256xf32>
    %c15_i32_107 = arith.constant 15 : i32
    %184 = tpu.dynamic_rotate %173 by %c15_i32_107 dim 1 : vector<8x256xf32>, i32 -> vector<8x256xf32>
    %c2_108 = arith.constant 2 : index
    %c0_109 = arith.constant 0 : index
    %c0_110 = arith.constant 0 : index
    %185 = vector.load %arg2[%c2_108, %c0_109, %c0_110] : memref<9x1x256xf32, #tpu.memory_space<vmem>>, vector<1x1x256xf32>
    %186 = vector.shape_cast %185 : vector<1x1x256xf32> to vector<1x256xf32>
    %187 = vector.broadcast %186 : vector<1x256xf32> to vector<8x256xf32>
    %188 = arith.mulf %184, %187 : vector<8x256xf32>
    %c1_i32_111 = arith.constant 1 : i32
    %189 = tpu.dynamic_rotate %173 by %c1_i32_111 dim 1 : vector<8x256xf32>, i32 -> vector<8x256xf32>
    %c3_112 = arith.constant 3 : index
    %c0_113 = arith.constant 0 : index
    %c0_114 = arith.constant 0 : index
    %190 = vector.load %arg2[%c3_112, %c0_113, %c0_114] : memref<9x1x256xf32, #tpu.memory_space<vmem>>, vector<1x1x256xf32>
    %191 = vector.shape_cast %190 : vector<1x1x256xf32> to vector<1x256xf32>
    %192 = vector.broadcast %191 : vector<1x256xf32> to vector<8x256xf32>
    %193 = arith.mulf %189, %192 : vector<8x256xf32>
    %c4_115 = arith.constant 4 : index
    %c0_116 = arith.constant 0 : index
    %c0_117 = arith.constant 0 : index
    %194 = vector.load %arg2[%c4_115, %c0_116, %c0_117] : memref<9x1x256xf32, #tpu.memory_space<vmem>>, vector<1x1x256xf32>
    %195 = vector.shape_cast %194 : vector<1x1x256xf32> to vector<1x256xf32>
    %196 = vector.broadcast %195 : vector<1x256xf32> to vector<8x256xf32>
    %197 = arith.mulf %173, %196 : vector<8x256xf32>
    %c255_i32_118 = arith.constant 255 : i32
    %198 = tpu.dynamic_rotate %173 by %c255_i32_118 dim 1 : vector<8x256xf32>, i32 -> vector<8x256xf32>
    %c5_119 = arith.constant 5 : index
    %c0_120 = arith.constant 0 : index
    %c0_121 = arith.constant 0 : index
    %199 = vector.load %arg2[%c5_119, %c0_120, %c0_121] : memref<9x1x256xf32, #tpu.memory_space<vmem>>, vector<1x1x256xf32>
    %200 = vector.shape_cast %199 : vector<1x1x256xf32> to vector<1x256xf32>
    %201 = vector.broadcast %200 : vector<1x256xf32> to vector<8x256xf32>
    %202 = arith.mulf %198, %201 : vector<8x256xf32>
    %c241_i32_122 = arith.constant 241 : i32
    %203 = tpu.dynamic_rotate %173 by %c241_i32_122 dim 1 : vector<8x256xf32>, i32 -> vector<8x256xf32>
    %c6_123 = arith.constant 6 : index
    %c0_124 = arith.constant 0 : index
    %c0_125 = arith.constant 0 : index
    %204 = vector.load %arg2[%c6_123, %c0_124, %c0_125] : memref<9x1x256xf32, #tpu.memory_space<vmem>>, vector<1x1x256xf32>
    %205 = vector.shape_cast %204 : vector<1x1x256xf32> to vector<1x256xf32>
    %206 = vector.broadcast %205 : vector<1x256xf32> to vector<8x256xf32>
    %207 = arith.mulf %203, %206 : vector<8x256xf32>
    %c240_i32_126 = arith.constant 240 : i32
    %208 = tpu.dynamic_rotate %173 by %c240_i32_126 dim 1 : vector<8x256xf32>, i32 -> vector<8x256xf32>
    %c7_127 = arith.constant 7 : index
    %c0_128 = arith.constant 0 : index
    %c0_129 = arith.constant 0 : index
    %209 = vector.load %arg2[%c7_127, %c0_128, %c0_129] : memref<9x1x256xf32, #tpu.memory_space<vmem>>, vector<1x1x256xf32>
    %210 = vector.shape_cast %209 : vector<1x1x256xf32> to vector<1x256xf32>
    %211 = vector.broadcast %210 : vector<1x256xf32> to vector<8x256xf32>
    %212 = arith.mulf %208, %211 : vector<8x256xf32>
    %c239_i32_130 = arith.constant 239 : i32
    %213 = tpu.dynamic_rotate %173 by %c239_i32_130 dim 1 : vector<8x256xf32>, i32 -> vector<8x256xf32>
    %c8_131 = arith.constant 8 : index
    %c0_132 = arith.constant 0 : index
    %c0_133 = arith.constant 0 : index
    %214 = vector.load %arg2[%c8_131, %c0_132, %c0_133] : memref<9x1x256xf32, #tpu.memory_space<vmem>>, vector<1x1x256xf32>
    %215 = vector.shape_cast %214 : vector<1x1x256xf32> to vector<1x256xf32>
    %216 = vector.broadcast %215 : vector<1x256xf32> to vector<8x256xf32>
    %217 = arith.mulf %213, %216 : vector<8x256xf32>
    %218 = tpu.concatenate %178, %183, %188, %193, %197, %202, %207, %212, %217 in 0 : vector<8x256xf32>, vector<8x256xf32>, vector<8x256xf32>, vector<8x256xf32>, vector<8x256xf32>, vector<8x256xf32>, vector<8x256xf32>, vector<8x256xf32>, vector<8x256xf32> -> vector<72x256xf32>
    %219 = arith.truncf %218 : vector<72x256xf32> to vector<72x256xbf16>
    %c2_134 = arith.constant 2 : index
    %c0_135 = arith.constant 0 : index
    %c0_136 = arith.constant 0 : index
    %220 = vector.load %arg3[%c2_134, %c0_135, %c0_136] : memref<3x8x72xbf16, #tpu.memory_space<vmem>>, vector<1x8x72xbf16>
    %221 = vector.shape_cast %220 : vector<1x8x72xbf16> to vector<8x72xbf16>
    %cst_137 = arith.constant dense<0.000000e+00> : vector<8x256xf32>
    %222 = tpu.matmul %221, %219, %cst_137 {dimension_numbers = #tpu.dot_dimension_numbers<[1], [0], [0], [1], [0, 0, 1, 1], [], []>} : vector<8x72xbf16>, vector<72x256xbf16>, vector<8x256xf32> -> vector<8x256xf32>
    %c2_138 = arith.constant 2 : index
    %c0_139 = arith.constant 0 : index
    %c0_140 = arith.constant 0 : index
    %223 = vector.load %arg4[%c2_138, %c0_139, %c0_140] : memref<3x8x3xf32, #tpu.memory_space<vmem>>, vector<1x8x3xf32>
    %224 = vector.shape_cast %223 : vector<1x8x3xf32> to vector<8x3xf32>
    %225 = vector.extract_strided_slice %224 {offsets = [0, 0], sizes = [8, 1], strides = [1, 1]} : vector<8x3xf32> to vector<8x1xf32>
    %226 = vector.broadcast %225 : vector<8x1xf32> to vector<8x256xf32>
    %227 = arith.addf %222, %226 : vector<8x256xf32>
    %cst_141 = arith.constant dense<0.000000e+00> : vector<8xf32>
    %228 = vector.multi_reduction <add>, %227, %cst_141 [1] : vector<8x256xf32> to vector<8xf32>
    %229 = vector.shape_cast %228 : vector<8xf32> to vector<8x1xf32>
    %230 = arith.mulf %227, %227 : vector<8x256xf32>
    %cst_142 = arith.constant dense<0.000000e+00> : vector<8xf32>
    %231 = vector.multi_reduction <add>, %230, %cst_142 [1] : vector<8x256xf32> to vector<8xf32>
    %232 = vector.shape_cast %231 : vector<8xf32> to vector<8x1xf32>
    %c2_143 = arith.constant 2 : index
    %c0_144 = arith.constant 0 : index
    %c0_145 = arith.constant 0 : index
    %233 = vector.load %arg5[%c2_143, %c0_144, %c0_145] : memref<3x4x8xf32, #tpu.memory_space<vmem>>, vector<1x4x8xf32>
    %234 = vector.shape_cast %233 : vector<1x4x8xf32> to vector<4x8xf32>
    %c2_146 = arith.constant 2 : index
    %c0_147 = arith.constant 0 : index
    %c0_148 = arith.constant 0 : index
    %235 = vector.load %arg6[%c2_146, %c0_147, %c0_148] : memref<3x8x4xf32, #tpu.memory_space<vmem>>, vector<1x8x4xf32>
    %236 = vector.shape_cast %235 : vector<1x8x4xf32> to vector<8x4xf32>
    %cst_149 = arith.constant dense<0.000000e+00> : vector<4x1xf32>
    %237 = tpu.matmul %234, %229, %cst_149 {dimension_numbers = #tpu.dot_dimension_numbers<[1], [0], [0], [1], [0, 0, 1, 1], [], []>} : vector<4x8xf32>, vector<8x1xf32>, vector<4x1xf32> -> vector<4x1xf32>
    %cst_150 = arith.constant dense<0.000000e+00> : vector<4x1xf32>
    %238 = tpu.matmul %234, %232, %cst_150 {dimension_numbers = #tpu.dot_dimension_numbers<[1], [0], [0], [1], [0, 0, 1, 1], [], []>} : vector<4x8xf32>, vector<8x1xf32>, vector<4x1xf32> -> vector<4x1xf32>
    %239 = arith.mulf %237, %237 : vector<4x1xf32>
    %240 = arith.subf %238, %239 : vector<4x1xf32>
    %cst_151 = arith.constant 0.000000e+00 : f32
    %241 = vector.broadcast %cst_151 : f32 to vector<4x1xf32>
    %242 = arith.maximumf %240, %241 : vector<4x1xf32>
    %cst_152 = arith.constant 9.99999974E-6 : f32
    %243 = vector.broadcast %cst_152 : f32 to vector<4x1xf32>
    %244 = arith.addf %242, %243 : vector<4x1xf32>
    %245 = math.rsqrt %244 : vector<4x1xf32>
    %cst_153 = arith.constant dense<0.000000e+00> : vector<8x1xf32>
    %246 = tpu.matmul %236, %237, %cst_153 {dimension_numbers = #tpu.dot_dimension_numbers<[1], [0], [0], [1], [0, 0, 1, 1], [], []>} : vector<8x4xf32>, vector<4x1xf32>, vector<8x1xf32> -> vector<8x1xf32>
    %cst_154 = arith.constant dense<0.000000e+00> : vector<8x1xf32>
    %247 = tpu.matmul %236, %245, %cst_154 {dimension_numbers = #tpu.dot_dimension_numbers<[1], [0], [0], [1], [0, 0, 1, 1], [], []>} : vector<8x4xf32>, vector<4x1xf32>, vector<8x1xf32> -> vector<8x1xf32>
    %248 = vector.extract_strided_slice %224 {offsets = [0, 1], sizes = [8, 1], strides = [1, 1]} : vector<8x3xf32> to vector<8x1xf32>
    %249 = arith.mulf %248, %247 : vector<8x1xf32>
    %250 = vector.extract_strided_slice %224 {offsets = [0, 2], sizes = [8, 1], strides = [1, 1]} : vector<8x3xf32> to vector<8x1xf32>
    %251 = arith.mulf %246, %249 : vector<8x1xf32>
    %252 = arith.subf %250, %251 : vector<8x1xf32>
    %253 = vector.broadcast %249 : vector<8x1xf32> to vector<8x256xf32>
    %254 = arith.mulf %227, %253 : vector<8x256xf32>
    %255 = vector.broadcast %252 : vector<8x1xf32> to vector<8x256xf32>
    %256 = arith.addf %254, %255 : vector<8x256xf32>
    %cst_155 = arith.constant 0.000000e+00 : f32
    %257 = vector.broadcast %cst_155 : f32 to vector<8x256xf32>
    %258 = arith.maximumf %256, %257 : vector<8x256xf32>
    %c0_156 = arith.constant 0 : index
    %c0_157 = arith.constant 0 : index
    %c0_158 = arith.constant 0 : index
    %259 = vector.load %arg7[%c0_156, %c0_157, %c0_158] : memref<1x8x256xf32, #tpu.memory_space<vmem>>, vector<1x8x256xf32>
    %260 = vector.shape_cast %259 : vector<1x8x256xf32> to vector<8x256xf32>
    %261 = vector.shape_cast %258 : vector<8x256xf32> to vector<1x8x256xf32>
    tpu.vector_store %arg7[%c0_156, %c0_157, %c0_158], %261 {strides = array<i32>} : memref<1x8x256xf32, #tpu.memory_space<vmem>>, vector<1x8x256xf32>,
    return
  }
  func.func @transform_0(%arg0: i32) -> (i32, i32, i32) {
    %c0_i32 = arith.constant 0 : i32
    %c0_i32_0 = arith.constant 0 : i32
    %c0_i32_1 = arith.constant 0 : i32
    return %arg0, %c0_i32, %c0_i32_0 : i32, i32, i32
  }
  func.func @transform_1(%arg0: i32) -> (i32, i32, i32) {
    %c0_i32 = arith.constant 0 : i32
    %c0_i32_0 = arith.constant 0 : i32
    %c0_i32_1 = arith.constant 0 : i32
    %c0_i32_2 = arith.constant 0 : i32
    return %c0_i32, %c0_i32_0, %c0_i32_1 : i32, i32, i32
  }
  func.func @transform_2(%arg0: i32) -> (i32, i32, i32) {
    %c0_i32 = arith.constant 0 : i32
    %c0_i32_0 = arith.constant 0 : i32
    %c0_i32_1 = arith.constant 0 : i32
    %c0_i32_2 = arith.constant 0 : i32
    return %c0_i32, %c0_i32_0, %c0_i32_1 : i32, i32, i32
  }
  func.func @transform_3(%arg0: i32) -> (i32, i32, i32) {
    %c0_i32 = arith.constant 0 : i32
    %c0_i32_0 = arith.constant 0 : i32
    %c0_i32_1 = arith.constant 0 : i32
    %c0_i32_2 = arith.constant 0 : i32
    return %c0_i32, %c0_i32_0, %c0_i32_1 : i32, i32, i32
  }
  func.func @transform_4(%arg0: i32) -> (i32, i32, i32) {
    %c0_i32 = arith.constant 0 : i32
    %c0_i32_0 = arith.constant 0 : i32
    %c0_i32_1 = arith.constant 0 : i32
    %c0_i32_2 = arith.constant 0 : i32
    return %c0_i32, %c0_i32_0, %c0_i32_1 : i32, i32, i32
  }
  func.func @transform_5(%arg0: i32) -> (i32, i32, i32) {
    %c0_i32 = arith.constant 0 : i32
    %c0_i32_0 = arith.constant 0 : i32
    %c0_i32_1 = arith.constant 0 : i32
    %c0_i32_2 = arith.constant 0 : i32
    return %c0_i32, %c0_i32_0, %c0_i32_1 : i32, i32, i32
  }
  func.func @transform_6(%arg0: i32) -> (i32, i32, i32) {
    %c0_i32 = arith.constant 0 : i32
    %c0_i32_0 = arith.constant 0 : i32
    %c0_i32_1 = arith.constant 0 : i32
    return %arg0, %c0_i32, %c0_i32_0 : i32, i32, i32
  }
}

</mosaic_0001>

<llo_original>
// kernel: res_block_forward.1
$region0: #{res_block_forward.1}
  #allocation0 [shape = 'u32[]', space=smem, size = 0x4, offset = 0x4, fixed_abs, tag = 'smem constant byte address 0x4 - core index']
  #allocation1 [shape = 'u32[144,128]{1,0:T(1,128)}', space=vmem, size = 0x12000, scoped, tag = 'internal scratch']
  %s0 = inlined_call_operand.vmem [shape: bf16[2,8,256], index: 0, kind: input, shape index: {}]
  %s1 = inlined_call_operand.vmem [shape: f32[9,1,256], index: 1, kind: input, shape index: {}]
  %s2 = inlined_call_operand.vmem [shape: bf16[3,8,72], index: 2, kind: input, shape index: {}]
  %s3 = inlined_call_operand.vmem [shape: f32[3,8,3], index: 3, kind: input, shape index: {}]
  %s4 = inlined_call_operand.vmem [shape: f32[3,4,8], index: 4, kind: input, shape index: {}]
  %s5 = inlined_call_operand.vmem [shape: f32[3,8,4], index: 5, kind: input, shape index: {}]
  %s6 = inlined_call_operand.vmem [shape: f32[2,8,256], index: 6, kind: output, shape index: {}]
  %s7 = sld [smem:[#allocation0]]
  $region57: #{res_block_forward.1} parent=0
    _
  %s9 = ssub.s32 1, %s7
  %s10 = scalar_select 0, %s9, %s7
  loop: start=0, step=1, limit=4
  $region2: #{res_block_forward.1} parent=0 // loop_pre_header
    _
  $region3: #{res_block_forward.1} parent=0 // loop_header
    %s12 = sphi 0, %s16
    %p13 = scmp.ge.s32.totalorder %s12, 4
    %s22 = sphi 0, %s24
    %s25 = sphi 0, %s22
    %s26 = sphi 0, %s25
    %s42 = sphi 0, %s26
    %s46 = sphi 0, %s46
    %s48 = sphi 0, %s46
    %s49 = sphi 0, %s48
    %s63 = sphi 0, %s49
    %s67 = sphi 0, %s67
    %s69 = sphi 0, %s67
    %s70 = sphi 0, %s69
    %s84 = sphi 0, %s70
    %s88 = sphi 0, %s88
    %s90 = sphi 0, %s88
    %s91 = sphi 0, %s90
    %s105 = sphi 0, %s91
    %s109 = sphi 0, %s109
    %s111 = sphi 0, %s109
    %s112 = sphi 0, %s111
    %s126 = sphi 0, %s112
    %s130 = sphi 0, %s130
    %s132 = sphi 0, %s130
    %s133 = sphi 0, %s132
    %s147 = sphi 0, %s133
    %s153 = sphi 0, %s155
    %s156 = sphi 0, %s153
    %s157 = sphi 0, %s156
    %s173 = sphi 0, %s157
  $region4: #{res_block_forward.1} parent=0 // loop_header_branch
    %15 = sbr.rel (%p13) target = $region8
  $region5: #{res_block_forward.1} parent=0 // loop_body
    %s17 = ssub.s32 %s12, 1
    %s18 = ssub.s32 %s12, 2
    %s19 = sadd.s32 %s12, 1
    %s20 = ssub.s32 %s12, %s19
    %p21 = scmp.eq.s32.totalorder %s20, 0
    %s23 = sadd.s32 %s22, 1
    %s24 = scalar_select %p21, %s22, %s23
    %p27 = pneg %p21
    %p28 = scmp.eq.s32.totalorder %s12, 1
    %p29 = por %p27, %p28
    %p30 = scmp.ne.s32.totalorder %s22, %s25
    %p31 = scmp.eq.s32.totalorder %s12, 0
    %p32 = por %p30, %p31
    %p33 = scmp.ne.s32.totalorder %s22, %s25
    %p34 = scmp.eq.s32.totalorder %s17, 1
    %p35 = por %p33, %p34
    %p36 = scmp.ne.s32.totalorder %s25, %s26
    %p37 = scmp.eq.s32.totalorder %s17, 0
    %p38 = por %p36, %p37
    %p39 = scmp.ne.s32.totalorder %s25, %s26
    %p40 = scmp.eq.s32.totalorder %s18, 1
    %p41 = por %p39, %p40
    %p43 = scmp.ne.s32.totalorder %s26, %s42
    %p44 = scmp.eq.s32.totalorder %s18, 0
    %p45 = por %p43, %p44
    %s47 = sadd.s32 %s46, 1
    %p50 = scmp.eq.s32.totalorder %s12, 1
    %p51 = scmp.ne.s32.totalorder %s46, %s48
    %p52 = scmp.eq.s32.totalorder %s12, 0
    %p53 = por %p51, %p52
    %p54 = scmp.ne.s32.totalorder %s46, %s48
    %p55 = scmp.eq.s32.totalorder %s17, 1
    %p56 = por %p54, %p55
    %p57 = scmp.ne.s32.totalorder %s48, %s49
    %p58 = scmp.eq.s32.totalorder %s17, 0
    %p59 = por %p57, %p58
    %p60 = scmp.ne.s32.totalorder %s48, %s49
    %p61 = scmp.eq.s32.totalorder %s18, 1
    %p62 = por %p60, %p61
    %p64 = scmp.ne.s32.totalorder %s49, %s63
    %p65 = scmp.eq.s32.totalorder %s18, 0
    %p66 = por %p64, %p65
    %s68 = sadd.s32 %s67, 1
    %p71 = scmp.eq.s32.totalorder %s12, 1
    %p72 = scmp.ne.s32.totalorder %s67, %s69
    %p73 = scmp.eq.s32.totalorder %s12, 0
    %p74 = por %p72, %p73
    %p75 = scmp.ne.s32.totalorder %s67, %s69
    %p76 = scmp.eq.s32.totalorder %s17, 1
    %p77 = por %p75, %p76
    %p78 = scmp.ne.s32.totalorder %s69, %s70
    %p79 = scmp.eq.s32.totalorder %s17, 0
    %p80 = por %p78, %p79
    %p81 = scmp.ne.s32.totalorder %s69, %s70
    %p82 = scmp.eq.s32.totalorder %s18, 1
    %p83 = por %p81, %p82
    %p85 = scmp.ne.s32.totalorder %s70, %s84
    %p86 = scmp.eq.s32.totalorder %s18, 0
    %p87 = por %p85, %p86
    %s89 = sadd.s32 %s88, 1
    %p92 = scmp.eq.s32.totalorder %s12, 1
    %p93 = scmp.ne.s32.totalorder %s88, %s90
    %p94 = scmp.eq.s32.totalorder %s12, 0
    %p95 = por %p93, %p94
    %p96 = scmp.ne.s32.totalorder %s88, %s90
    %p97 = scmp.eq.s32.totalorder %s17, 1
    %p98 = por %p96, %p97
    %p99 = scmp.ne.s32.totalorder %s90, %s91
    %p100 = scmp.eq.s32.totalorder %s17, 0
    %p101 = por %p99, %p100
    %p102 = scmp.ne.s32.totalorder %s90, %s91
    %p103 = scmp.eq.s32.totalorder %s18, 1
    %p104 = por %p102, %p103
    %p106 = scmp.ne.s32.totalorder %s91, %s105
    %p107 = scmp.eq.s32.totalorder %s18, 0
    %p108 = por %p106, %p107
    %s110 = sadd.s32 %s109, 1
    %p113 = scmp.eq.s32.totalorder %s12, 1
    %p114 = scmp.ne.s32.totalorder %s109, %s111
    %p115 = scmp.eq.s32.totalorder %s12, 0
    %p116 = por %p114, %p115
    %p117 = scmp.ne.s32.totalorder %s109, %s111
    %p118 = scmp.eq.s32.totalorder %s17, 1
    %p119 = por %p117, %p118
    %p120 = scmp.ne.s32.totalorder %s111, %s112
    %p121 = scmp.eq.s32.totalorder %s17, 0
    %p122 = por %p120, %p121
    %p123 = scmp.ne.s32.totalorder %s111, %s112
    %p124 = scmp.eq.s32.totalorder %s18, 1
    %p125 = por %p123, %p124
    %p127 = scmp.ne.s32.totalorder %s112, %s126
    %p128 = scmp.eq.s32.totalorder %s18, 0
    %p129 = por %p127, %p128
    %s131 = sadd.s32 %s130, 1
    %p134 = scmp.eq.s32.totalorder %s12, 1
    %p135 = scmp.ne.s32.totalorder %s130, %s132
    %p136 = scmp.eq.s32.totalorder %s12, 0
    %p137 = por %p135, %p136
    %p138 = scmp.ne.s32.totalorder %s130, %s132
    %p139 = scmp.eq.s32.totalorder %s17, 1
    %p140 = por %p138, %p139
    %p141 = scmp.ne.s32.totalorder %s132, %s133
    %p142 = scmp.eq.s32.totalorder %s17, 0
    %p143 = por %p141, %p142
    %p144 = scmp.ne.s32.totalorder %s132, %s133
    %p145 = scmp.eq.s32.totalorder %s18, 1
    %p146 = por %p144, %p145
    %p148 = scmp.ne.s32.totalorder %s133, %s147
    %p149 = scmp.eq.s32.totalorder %s18, 0
    %p150 = por %p148, %p149
    %s151 = ssub.s32 %s12, %s19
    %p152 = scmp.eq.s32.totalorder %s151, 0
    %s154 = sadd.s32 %s153, 1
    %s155 = scalar_select %p152, %s153, %s154
    %p158 = pneg %p152
    %p159 = scmp.eq.s32.totalorder %s12, 1
    %p160 = por %p158, %p159
    %p161 = scmp.ne.s32.totalorder %s153, %s156
    %p162 = scmp.eq.s32.totalorder %s12, 0
    %p163 = por %p161, %p162
    %p164 = scmp.ne.s32.totalorder %s153, %s156
    %p165 = scmp.eq.s32.totalorder %s17, 1
    %p166 = por %p164, %p165
    %p167 = scmp.ne.s32.totalorder %s156, %s157
    %p168 = scmp.eq.s32.totalorder %s17, 0
    %p169 = por %p167, %p168
    %p170 = scmp.ne.s32.totalorder %s156, %s157
    %p171 = scmp.eq.s32.totalorder %s18, 1
    %p172 = por %p170, %p171
    %p174 = scmp.ne.s32.totalorder %s157, %s173
    %p175 = scmp.eq.s32.totalorder %s18, 0
    %p176 = por %p174, %p175
    %p177 = scmp.le.s32.totalorder 1, %s12
    %p178 = scmp.lt.s32.totalorder %s12, 3
    %p179 = pnand %p177, %p178
    %p180 = pneg %p179
    // Predicated region
    $region9: #{res_block_forward.1} parent=5 // pred_check
      _
    $region10: #{res_block_forward.1} parent=5 // pred_check_branch
      %182 = sbr.rel (%p179) target = $region12
    $region11: #{res_block_forward.1} parent=5 // pred_region
      %s183 = ssub.s32 %s12, 1
      // Predicated region
      $region13: #{res_block_forward.1} parent=11 // pred_check
        %p184 = pneg %p59
      $region14: #{res_block_forward.1} parent=11 // pred_check_branch
        %186 = sbr.rel (%p184) target = $region16
      $region15: #{res_block_forward.1} parent=11 // pred_region
        _
      $region16: #{res_block_forward.1} parent=11 // pred_fallthru
        _
      // Predicated region
      $region17: #{res_block_forward.1} parent=11 // pred_check
        %p187 = pneg %p80
      $region18: #{res_block_forward.1} parent=11 // pred_check_branch
        %189 = sbr.rel (%p187) target = $region20
      $region19: #{res_block_forward.1} parent=11 // pred_region
        _
      $region20: #{res_block_forward.1} parent=11 // pred_fallthru
        _
      // Predicated region
      $region21: #{res_block_forward.1} parent=11 // pred_check
        %p190 = pneg %p101
      $region22: #{res_block_forward.1} parent=11 // pred_check_branch
        %192 = sbr.rel (%p190) target = $region24
      $region23: #{res_block_forward.1} parent=11 // pred_region
        _
      $region24: #{res_block_forward.1} parent=11 // pred_fallthru
        _
      // Predicated region
      $region25: #{res_block_forward.1} parent=11 // pred_check
        %p193 = pneg %p122
      $region26: #{res_block_forward.1} parent=11 // pred_check_branch
        %195 = sbr.rel (%p193) target = $region28
      $region27: #{res_block_forward.1} parent=11 // pred_region
        _
      $region28: #{res_block_forward.1} parent=11 // pred_fallthru
        _
      // Predicated region
      $region29: #{res_block_forward.1} parent=11 // pred_check
        %p196 = pneg %p143
      $region30: #{res_block_forward.1} parent=11 // pred_check_branch
        %198 = sbr.rel (%p196) target = $region32
      $region31: #{res_block_forward.1} parent=11 // pred_region
        _
      $region32: #{res_block_forward.1} parent=11 // pred_fallthru
        _
    $region12: #{res_block_forward.1} parent=5 // pred_fallthru
      _
    %p199 = scmp.lt.s32.totalorder %s12, 2
    // Predicated region
    $region33: #{res_block_forward.1} parent=5 // pred_check
      %p200 = pneg %p199
    $region34: #{res_block_forward.1} parent=5 // pred_check_branch
      %202 = sbr.rel (%p200) target = $region36
    $region35: #{res_block_forward.1} parent=5 // pred_region
      // Predicated region
      $region37: #{res_block_forward.1} parent=35 // pred_check
        %p203 = pneg %p32
      $region38: #{res_block_forward.1} parent=35 // pred_check_branch
        %205 = sbr.rel (%p203) target = $region40
      $region39: #{res_block_forward.1} parent=35 // pred_region
        %p206 = scmp.lt.s32.totalorder %s12, 1
        %s207 = scalar_select %p206, %s12, 1
        %s208 = smul.addr %s207, 2
        %s209 = smul.addr %s208, 4
        %s210 = scalar_lea.vmem %s0, %s209
      $region40: #{res_block_forward.1} parent=35 // pred_fallthru
        _
    $region36: #{res_block_forward.1} parent=5 // pred_fallthru
      _
    %p211 = scmp.le.s32.totalorder 1, %s12
    %p212 = scmp.lt.s32.totalorder %s12, 3
    %p213 = pnand %p211, %p212
    %p214 = pneg %p213
    // Predicated region
    $region41: #{res_block_forward.1} parent=5 // pred_check
      _
    $region42: #{res_block_forward.1} parent=5 // pred_check_branch
      %216 = sbr.rel (%p213) target = $region44
    $region43: #{res_block_forward.1} parent=5 // pred_region
      %s217 = ssub.s32 %s12, 1
      %p218 = scmp.lt.s32.totalorder %s17, 1
      %s219 = scalar_select %p218, %s17, 1
      %s220 = smul.addr %s219, 2
      %s221 = smul.addr %s220, 4
      %s222 = scalar_lea.vmem %s0, %s221
      %p223 = pneg %p38
      %p224 = pneg %p35
      %p225 = pneg %p59
      %p226 = pneg %p56
      %p227 = pneg %p80
      %p228 = pneg %p77
      %p229 = pneg %p101
      %p230 = pneg %p98
      %p231 = pneg %p122
      %p232 = pneg %p119
      %p233 = pneg %p143
      %p234 = pneg %p140
      %p235 = pneg %p169
      %p236 = pneg %p166
      %p237 = scmp.lt.s32.totalorder %s17, 1
      %s238 = scalar_select %p237, %s17, 1
      %s239 = smul.addr %s238, 2
      %s240 = smul.addr %s239, 8
      %s241 = scalar_lea.vmem %s6, %s240
      %p242 = scmp.lt.s32.totalorder %s17, 1
      %s243 = scalar_select %p242, %s17, 1
      %s244 = smul.addr %s243, 2
      %s245 = smul.addr %s244, 4
      %s246 = scalar_lea.vmem %s0, %s245
      %p247 = scmp.lt.s32.totalorder %s17, 1
      %s248 = scalar_select %p247, %s17, 1
      %s249 = smul.addr %s248, 2
      %s250 = smul.addr %s249, 8
      %s251 = scalar_lea.vmem %s6, %s250
      %v253 = vld [vmem:[%s246] sm:$0xff]
      %v254 = vunpack.c.l.bf16 %v253
      %v255 = vunpack.c.h.bf16 %v253
      %256 = vrot.lane.b32.xlu0 %v254, 17
      %v257 = vpop.permute.xlu0 %256
      %258 = vrot.lane.b32.xlu0 %v255, 17
      %v259 = vpop.permute.xlu0 %258
      %v260 = vlaneseq
      %v261 = vand.u32 %v260, 127
      %vm262 = vcmp.lt.s32.totalorder %v261, 17
      %v263 = vsel %vm262, %v257, %v259
      %v264 = vsel %vm262, %v259, %v257
      %v265 = vld [vmem:[%s1] sm:$0x3]
      %v267 = vlaneseq
      %v268 = vshrl.u32 %v267, 7
      %v269 = vsub.s32 0, %v268
      %v270 = vrot.slane %v265, %v269
      %v271 = vlaneseq
      %v272 = vshrl.u32 %v271, 7
      %v273 = vsub.s32 1, %v272
      %v274 = vrot.slane %v265, %v273
      %v277 = vmul.f32 %v264, %v270
      %v278 = vmul.f32 %v263, %v274
      %279 = vrot.lane.b32.xlu0 %v254, 16
      %v280 = vpop.permute.xlu0 %279
      %281 = vrot.lane.b32.xlu0 %v255, 16
      %v282 = vpop.permute.xlu0 %281
      %vm283 = vcmp.lt.s32.totalorder %v261, 16
      %v284 = vsel %vm283, %v280, %v282
      %v285 = vsel %vm283, %v282, %v280
      %s286 = scalar_lea.vmem %s1, 2
      %v287 = vld [vmem:[%s286] sm:$0x3]
      %v289 = vlaneseq
      %v290 = vshrl.u32 %v289, 7
      %v291 = vsub.s32 0, %v290
      %v292 = vrot.slane %v287, %v291
      %v293 = vlaneseq
      %v294 = vshrl.u32 %v293, 7
      %v295 = vsub.s32 1, %v294
      %v296 = vrot.slane %v287, %v295
      %v299 = vmul.f32 %v285, %v292
      %v300 = vmul.f32 %v284, %v296
      %301 = vrot.lane.b32.xlu0 %v254, 15
      %v302 = vpop.permute.xlu0 %301
      %303 = vrot.lane.b32.xlu0 %v255, 15
      %v304 = vpop.permute.xlu0 %303
      %vm305 = vcmp.lt.s32.totalorder %v261, 15
      %v306 = vsel %vm305, %v302, %v304
      %v307 = vsel %vm305, %v304, %v302
      %s308 = scalar_lea.vmem %s1, 4
      %v309 = vld [vmem:[%s308] sm:$0x3]
      %v311 = vlaneseq
      %v312 = vshrl.u32 %v311, 7
      %v313 = vsub.s32 0, %v312
      %v314 = vrot.slane %v309, %v313
      %v315 = vlaneseq
      %v316 = vshrl.u32 %v315, 7
      %v317 = vsub.s32 1, %v316
      %v318 = vrot.slane %v309, %v317
      %v321 = vmul.f32 %v307, %v314
      %v322 = vmul.f32 %v306, %v318
      %323 = vrot.lane.b32.xlu0 %v254, 1
      %v324 = vpop.permute.xlu0 %323
      %325 = vrot.lane.b32.xlu0 %v255, 1
      %v326 = vpop.permute.xlu0 %325
      %vm327 = vcmp.lt.s32.totalorder %v261, 1
      %v328 = vsel %vm327, %v324, %v326
      %v329 = vsel %vm327, %v326, %v324
      %s330 = scalar_lea.vmem %s1, 6
      %v331 = vld [vmem:[%s330] sm:$0x3]
      %v333 = vlaneseq
      %v334 = vshrl.u32 %v333, 7
      %v335 = vsub.s32 0, %v334
      %v336 = vrot.slane %v331, %v335
      %v337 = vlaneseq
      %v338 = vshrl.u32 %v337, 7
      %v339 = vsub.s32 1, %v338
      %v340 = vrot.slane %v331, %v339
      %v343 = vmul.f32 %v329, %v336
      %v344 = vmul.f32 %v328, %v340
      %s345 = scalar_lea.vmem %s1, 8
      %v346 = vld [vmem:[%s345] sm:$0x3]
      %v348 = vlaneseq
      %v349 = vshrl.u32 %v348, 7
      %v350 = vsub.s32 0, %v349
      %v351 = vrot.slane %v346, %v350
      %v352 = vlaneseq
      %v353 = vshrl.u32 %v352, 7
      %v354 = vsub.s32 1, %v353
      %v355 = vrot.slane %v346, %v354
      %v358 = vmul.f32 %v254, %v351
      %v359 = vmul.f32 %v255, %v355
      %360 = vrot.lane.b32.xlu0 %v254, 127
      %v361 = vpop.permute.xlu0 %360
      %362 = vrot.lane.b32.xlu0 %v255, 127
      %v363 = vpop.permute.xlu0 %362
      %vm364 = vcmp.lt.s32.totalorder %v261, 127
      %v365 = vsel %vm364, %v361, %v363
      %v366 = vsel %vm364, %v363, %v361
      %s367 = scalar_lea.vmem %s1, 10
      %v368 = vld [vmem:[%s367] sm:$0x3]
      %v370 = vlaneseq
      %v371 = vshrl.u32 %v370, 7
      %v372 = vsub.s32 0, %v371
      %v373 = vrot.slane %v368, %v372
      %v374 = vlaneseq
      %v375 = vshrl.u32 %v374, 7
      %v376 = vsub.s32 1, %v375
      %v377 = vrot.slane %v368, %v376
      %v380 = vmul.f32 %v365, %v373
      %v381 = vmul.f32 %v366, %v377
      %382 = vrot.lane.b32.xlu0 %v254, 113
      %v383 = vpop.permute.xlu0 %382
      %384 = vrot.lane.b32.xlu0 %v255, 113
      %v385 = vpop.permute.xlu0 %384
      %vm386 = vcmp.lt.s32.totalorder %v261, 113
      %v387 = vsel %vm386, %v383, %v385
      %v388 = vsel %vm386, %v385, %v383
      %s389 = scalar_lea.vmem %s1, 12
      %v390 = vld [vmem:[%s389] sm:$0x3]
      %v392 = vlaneseq
      %v393 = vshrl.u32 %v392, 7
      %v394 = vsub.s32 0, %v393
      %v395 = vrot.slane %v390, %v394
      %v396 = vlaneseq
      %v397 = vshrl.u32 %v396, 7
      %v398 = vsub.s32 1, %v397
      %v399 = vrot.slane %v390, %v398
      %v402 = vmul.f32 %v387, %v395
      %v403 = vmul.f32 %v388, %v399
      %404 = vrot.lane.b32.xlu0 %v254, 112
      %v405 = vpop.permute.xlu0 %404
      %406 = vrot.lane.b32.xlu0 %v255, 112
      %v407 = vpop.permute.xlu0 %406
      %vm408 = vcmp.lt.s32.totalorder %v261, 112
      %v409 = vsel %vm408, %v405, %v407
      %v410 = vsel %vm408, %v407, %v405
      %s411 = scalar_lea.vmem %s1, 14
      %v412 = vld [vmem:[%s411] sm:$0x3]
      %v414 = vlaneseq
      %v415 = vshrl.u32 %v414, 7
      %v416 = vsub.s32 0, %v415
      %v417 = vrot.slane %v412, %v416
      %v418 = vlaneseq
      %v419 = vshrl.u32 %v418, 7
      %v420 = vsub.s32 1, %v419
      %v421 = vrot.slane %v412, %v420
      %v424 = vmul.f32 %v409, %v417
      %v425 = vmul.f32 %v410, %v421
      %426 = vrot.lane.b32.xlu0 %v254, 111
      %v427 = vpop.permute.xlu0 %426
      %428 = vrot.lane.b32.xlu0 %v255, 111
      %v429 = vpop.permute.xlu0 %428
      %vm430 = vcmp.lt.s32.totalorder %v261, 111
      %v431 = vsel %vm430, %v427, %v429
      %v432 = vsel %vm430, %v429, %v427
      %s433 = scalar_lea.vmem %s1, 16
      %v434 = vld [vmem:[%s433] sm:$0x3]
      %v436 = vlaneseq
      %v437 = vshrl.u32 %v436, 7
      %v438 = vsub.s32 0, %v437
      %v439 = vrot.slane %v434, %v438
      %v440 = vlaneseq
      %v441 = vshrl.u32 %v440, 7
      %v442 = vsub.s32 1, %v441
      %v443 = vrot.slane %v434, %v442
      %v446 = vmul.f32 %v431, %v439
      %v447 = vmul.f32 %v432, %v443
      %v448 = vpack.c.bf16 %v299, %v277
      %v449 = vpack.c.bf16 %v300, %v278
      %v450 = vpack.c.bf16 %v343, %v321
      %v451 = vpack.c.bf16 %v344, %v322
      %v452 = vpack.c.bf16 %v380, %v358
      %v453 = vpack.c.bf16 %v381, %v359
      %v454 = vpack.c.bf16 %v424, %v402
      %v455 = vpack.c.bf16 %v425, %v403
      %v456 = vpack.c.bf16 %v446, %v446
      %v457 = vpack.c.bf16 %v447, %v447
      %v458 = vld [vmem:[%s2] sm:$0xf]
      %v459 = vld [vmem:[%s3] sm:$0xff]
      %461 = vset.pattern.permute.xlu0 0
      %462 = vperm.xlu0 %461, %v459
      %v463 = vpop.permute.xlu0 %462
      %vm465 = vcmask 588800
      %v467 = vsel %vm465, %v458, 0
      %vm469 = vcmask 1043456
      %v471 = vsel %vm469, %v456, 0
      %v474 = vsel %vm469, %v457, 0
      %476 = vmatprep.subr.bf16.mxu0 %v449
      %477 = vmatpush1.bf16.msra.mxu0 %v448
      %478 = vmatprep.subr.bf16.mxu0 %v451
      %479 = vmatpush1.bf16.msra.mxu0 %v450
      %480 = vmatprep.subr.bf16.mxu0 %v453
      %481 = vmatpush1.bf16.msra.mxu0 %v452
      %482 = vmatprep.subr.bf16.mxu0 %v455
      %483 = vmatpush1.bf16.msra.mxu0 %v454
      %484 = vmatprep.subr.bf16.mxu0 %v474
      %485 = vmatpush1.bf16.msra.mxu0 %v471
      %486 = vmatprep.subr.bf16.mxu0 0
      %487 = vmatpush1.bf16.msra.mxu0 0
      %488 = vmatprep.subr.bf16.mxu0 0
      %489 = vmatpush1.bf16.msra.mxu0 0
      %490 = vmatprep.subr.bf16.mxu0 0
      %491 = vmatpush1.bf16.msra.mxu0 0
      %492 = vmatprep.subr.bf16.mxu0 0
      %493 = vmatpush1.bf16.msra.mxu0 0
      %494 = vmatprep.subr.bf16.mxu0 0
      %495 = vmatpush1.bf16.msra.mxu0 0
      %496 = vmatprep.subr.bf16.mxu0 0
      %497 = vmatpush1.bf16.msra.mxu0 0
      %498 = vmatprep.subr.bf16.mxu0 0
      %499 = vmatpush1.bf16.msra.mxu0 0
      %500 = vmatprep.subr.bf16.mxu0 0
      %501 = vmatpush1.bf16.msra.mxu0 0
      %502 = vmatprep.subr.bf16.mxu0 0
      %503 = vmatpush1.bf16.msra.mxu0 0
      %504 = vmatprep.subr.bf16.mxu0 0
      %505 = vmatpush1.bf16.msra.mxu0 0
      %506 = vmatprep.subr.bf16.mxu0 0
      %507 = vmatpush1.bf16.msra.mxu0 0
      %508 = vmatprep.mubr.bf16.mxu0 0
      %509 = vmatmul.mubr.bf16.gmra.mrb[0].mxu0 %v467
      %v510 = vpop.f32.mrb[0].mxu0
      %v511 = vadd.f32 %v463, %v510
      %v512 = vpop.f32.mrb[0].mxu0
      %v513 = vadd.f32 %v463, %v512
      %v514 = vpop.f32.mrb[0].mxu0
      %v515 = vpop.f32.mrb[0].mxu0
      %516 = vdwg.mxu0
      %v517 = vadd.f32 %v511, %v513
      %518 = vadd.xlane.f32.xlu0 %v517
      %v519 = vpop.xlane.xlu0 %518
      %v520 = vmul.f32 %v511, %v511
      %v521 = vmul.f32 %v513, %v513
      %v522 = vadd.f32 %v520, %v521
      %523 = vadd.xlane.f32.xlu0 %v522
      %v524 = vpop.xlane.xlu0 %523
      %v525 = vld [vmem:[%s4] sm:$0xf]
      %v526 = vld [vmem:[%s5] sm:$0xff]
      %vm527 = vcmask 64512
      %v529 = vsel %vm527, %v525, 0
      %531 = vmatprep.subr.mxu0 0.0
      %532 = vmatpush1.msra.mxu0 %v519
      %533 = vmatprep.subr.mxu0 0.0
      %534 = vmatpush1.msra.mxu0 0.0
      %535 = vmatprep.subr.mxu0 0.0
      %536 = vmatpush1.msra.mxu0 0.0
      %537 = vmatprep.subr.mxu0 0.0
      %538 = vmatpush1.msra.mxu0 0.0
      %539 = vmatprep.subr.mxu0 0.0
      %540 = vmatpush1.msra.mxu0 0.0
      %541 = vmatprep.subr.mxu0 0.0
      %542 = vmatpush1.msra.mxu0 0.0
      %543 = vmatprep.subr.mxu0 0.0
      %544 = vmatpush1.msra.mxu0 0.0
      %545 = vmatprep.subr.mxu0 0.0
      %546 = vmatpush1.msra.mxu0 0.0
      %547 = vmatprep.subr.mxu0 0.0
      %548 = vmatpush1.msra.mxu0 0.0
      %549 = vmatprep.subr.mxu0 0.0
      %550 = vmatpush1.msra.mxu0 0.0
      %551 = vmatprep.subr.mxu0 0.0
      %552 = vmatpush1.msra.mxu0 0.0
      %553 = vmatprep.subr.mxu0 0.0
      %554 = vmatpush1.msra.mxu0 0.0
      %555 = vmatprep.subr.mxu0 0.0
      %556 = vmatpush1.msra.mxu0 0.0
      %557 = vmatprep.subr.mxu0 0.0
      %558 = vmatpush1.msra.mxu0 0.0
      %559 = vmatprep.subr.mxu0 0.0
      %560 = vmatpush1.msra.mxu0 0.0
      %561 = vmatprep.subr.mxu0 0.0
      %562 = vmatpush1.msra.mxu0 0.0
      %563 = vmatprep.subr.mxu0 0.0
      %564 = vmatpush1.msra.mxu0 0.0
      %565 = vmatprep.subr.mxu0 0.0
      %566 = vmatpush1.msra.mxu0 0.0
      %567 = vmatprep.subr.mxu0 0.0
      %568 = vmatpush1.msra.mxu0 0.0
      %569 = vmatprep.subr.mxu0 0.0
      %570 = vmatpush1.msra.mxu0 0.0
      %571 = vmatprep.subr.mxu0 0.0
      %572 = vmatpush1.msra.mxu0 0.0
      %573 = vmatprep.subr.mxu0 0.0
      %574 = vmatpush1.msra.mxu0 0.0
      %575 = vmatprep.subr.mxu0 0.0
      %576 = vmatpush1.msra.mxu0 0.0
      %577 = vmatprep.subr.mxu0 0.0
      %578 = vmatpush1.msra.mxu0 0.0
      %579 = vmatprep.subr.mxu0 0.0
      %580 = vmatpush1.msra.mxu0 0.0
      %581 = vmatprep.subr.mxu0 0.0
      %582 = vmatpush1.msra.mxu0 0.0
      %583 = vmatprep.subr.mxu0 0.0
      %584 = vmatpush1.msra.mxu0 0.0
      %585 = vmatprep.subr.mxu0 0.0
      %586 = vmatpush1.msra.mxu0 0.0
      %587 = vmatprep.subr.mxu0 0.0
      %588 = vmatpush1.msra.mxu0 0.0
      %589 = vmatprep.subr.mxu0 0.0
      %590 = vmatpush1.msra.mxu0 0.0
      %591 = vmatprep.subr.mxu0 0.0
      %592 = vmatpush1.msra.mxu0 0.0
      %593 = vmatprep.subr.mxu0 0.0
      %594 = vmatpush1.msra.mxu0 0.0
      %595 = vmatprep.mubr.f32.mxu0 0.0
      %596 = vmatmul.mubr.f32.gmra.mrb[0].mxu0 %v529
      %v597 = vpop.f32.mrb[0].mxu0
      %v598 = vadd.f32 0.0, %v597
      %v599 = vpop.f32.mrb[0].mxu0
      %600 = vdwg.mxu0
      %601 = vmatprep.subr.mxu0 0.0
      %602 = vmatpush1.msra.mxu0 %v524
      %603 = vmatprep.subr.mxu0 0.0
      %604 = vmatpush1.msra.mxu0 0.0
      %605 = vmatprep.subr.mxu0 0.0
      %606 = vmatpush1.msra.mxu0 0.0
      %607 = vmatprep.subr.mxu0 0.0
      %608 = vmatpush1.msra.mxu0 0.0
      %609 = vmatprep.subr.mxu0 0.0
      %610 = vmatpush1.msra.mxu0 0.0
      %611 = vmatprep.subr.mxu0 0.0
      %612 = vmatpush1.msra.mxu0 0.0
      %613 = vmatprep.subr.mxu0 0.0
      %614 = vmatpush1.msra.mxu0 0.0
      %615 = vmatprep.subr.mxu0 0.0
      %616 = vmatpush1.msra.mxu0 0.0
      %617 = vmatprep.subr.mxu0 0.0
      %618 = vmatpush1.msra.mxu0 0.0
      %619 = vmatprep.subr.mxu0 0.0
      %620 = vmatpush1.msra.mxu0 0.0
      %621 = vmatprep.subr.mxu0 0.0
      %622 = vmatpush1.msra.mxu0 0.0
      %623 = vmatprep.subr.mxu0 0.0
      %624 = vmatpush1.msra.mxu0 0.0
      %625 = vmatprep.subr.mxu0 0.0
      %626 = vmatpush1.msra.mxu0 0.0
      %627 = vmatprep.subr.mxu0 0.0
      %628 = vmatpush1.msra.mxu0 0.0
      %629 = vmatprep.subr.mxu0 0.0
      %630 = vmatpush1.msra.mxu0 0.0
      %631 = vmatprep.subr.mxu0 0.0
      %632 = vmatpush1.msra.mxu0 0.0
      %633 = vmatprep.subr.mxu0 0.0
      %634 = vmatpush1.msra.mxu0 0.0
      %635 = vmatprep.subr.mxu0 0.0
      %636 = vmatpush1.msra.mxu0 0.0
      %637 = vmatprep.subr.mxu0 0.0
      %638 = vmatpush1.msra.mxu0 0.0
      %639 = vmatprep.subr.mxu0 0.0
      %640 = vmatpush1.msra.mxu0 0.0
      %641 = vmatprep.subr.mxu0 0.0
      %642 = vmatpush1.msra.mxu0 0.0
      %643 = vmatprep.subr.mxu0 0.0
      %644 = vmatpush1.msra.mxu0 0.0
      %645 = vmatprep.subr.mxu0 0.0
      %646 = vmatpush1.msra.mxu0 0.0
      %647 = vmatprep.subr.mxu0 0.0
      %648 = vmatpush1.msra.mxu0 0.0
      %649 = vmatprep.subr.mxu0 0.0
      %650 = vmatpush1.msra.mxu0 0.0
      %651 = vmatprep.subr.mxu0 0.0
      %652 = vmatpush1.msra.mxu0 0.0
      %653 = vmatprep.subr.mxu0 0.0
      %654 = vmatpush1.msra.mxu0 0.0
      %655 = vmatprep.subr.mxu0 0.0
      %656 = vmatpush1.msra.mxu0 0.0
      %657 = vmatprep.subr.mxu0 0.0
      %658 = vmatpush1.msra.mxu0 0.0
      %659 = vmatprep.subr.mxu0 0.0
      %660 = vmatpush1.msra.mxu0 0.0
      %661 = vmatprep.subr.mxu0 0.0
      %662 = vmatpush1.msra.mxu0 0.0
      %663 = vmatprep.subr.mxu0 0.0
      %664 = vmatpush1.msra.mxu0 0.0
      %665 = vmatprep.mubr.f32.mxu0 0.0
      %666 = vmatmul.mubr.f32.gmra.mrb[0].mxu0 %v529
      %v667 = vpop.f32.mrb[0].mxu0
      %v668 = vadd.f32 0.0, %v667
      %v669 = vpop.f32.mrb[0].mxu0
      %670 = vdwg.mxu0
      %v671 = vmul.f32 %v598, %v598
      %v672 = vsub.f32 %v668, %v671
      %v673 = vmax.f32 %v672, 0.0
      %v674 = vadd.f32 %v673, 1e-05
      %v675 = vrsqrt.pop %v674
      %vm676 = vcmask 31744
      %v678 = vsel %vm676, %v526, 0
      %v681 = vsel %vm469, %v598, 0
      %683 = vmatprep.subr.mxu0 0.0
      %684 = vmatpush1.msra.mxu0 %v681
      %685 = vmatprep.subr.mxu0 0.0
      %686 = vmatpush1.msra.mxu0 0.0
      %687 = vmatprep.subr.mxu0 0.0
      %688 = vmatpush1.msra.mxu0 0.0
      %689 = vmatprep.subr.mxu0 0.0
      %690 = vmatpush1.msra.mxu0 0.0
      %691 = vmatprep.subr.mxu0 0.0
      %692 = vmatpush1.msra.mxu0 0.0
      %693 = vmatprep.subr.mxu0 0.0
      %694 = vmatpush1.msra.mxu0 0.0
      %695 = vmatprep.subr.mxu0 0.0
      %696 = vmatpush1.msra.mxu0 0.0
      %697 = vmatprep.subr.mxu0 0.0
      %698 = vmatpush1.msra.mxu0 0.0
      %699 = vmatprep.subr.mxu0 0.0
      %700 = vmatpush1.msra.mxu0 0.0
      %701 = vmatprep.subr.mxu0 0.0
      %702 = vmatpush1.msra.mxu0 0.0
      %703 = vmatprep.subr.mxu0 0.0
      %704 = vmatpush1.msra.mxu0 0.0
      %705 = vmatprep.subr.mxu0 0.0
      %706 = vmatpush1.msra.mxu0 0.0
      %707 = vmatprep.subr.mxu0 0.0
      %708 = vmatpush1.msra.mxu0 0.0
      %709 = vmatprep.subr.mxu0 0.0
      %710 = vmatpush1.msra.mxu0 0.0
      %711 = vmatprep.subr.mxu0 0.0
      %712 = vmatpush1.msra.mxu0 0.0
      %713 = vmatprep.subr.mxu0 0.0
      %714 = vmatpush1.msra.mxu0 0.0
      %715 = vmatprep.subr.mxu0 0.0
      %716 = vmatpush1.msra.mxu0 0.0
      %717 = vmatprep.subr.mxu0 0.0
      %718 = vmatpush1.msra.mxu0 0.0
      %719 = vmatprep.subr.mxu0 0.0
      %720 = vmatpush1.msra.mxu0 0.0
      %721 = vmatprep.subr.mxu0 0.0
      %722 = vmatpush1.msra.mxu0 0.0
      %723 = vmatprep.subr.mxu0 0.0
      %724 = vmatpush1.msra.mxu0 0.0
      %725 = vmatprep.subr.mxu0 0.0
      %726 = vmatpush1.msra.mxu0 0.0
      %727 = vmatprep.subr.mxu0 0.0
      %728 = vmatpush1.msra.mxu0 0.0
      %729 = vmatprep.subr.mxu0 0.0
      %730 = vmatpush1.msra.mxu0 0.0
      %731 = vmatprep.subr.mxu0 0.0
      %732 = vmatpush1.msra.mxu0 0.0
      %733 = vmatprep.subr.mxu0 0.0
      %734 = vmatpush1.msra.mxu0 0.0
      %735 = vmatprep.subr.mxu0 0.0
      %736 = vmatpush1.msra.mxu0 0.0
      %737 = vmatprep.subr.mxu0 0.0
      %738 = vmatpush1.msra.mxu0 0.0
      %739 = vmatprep.subr.mxu0 0.0
      %740 = vmatpush1.msra.mxu0 0.0
      %741 = vmatprep.subr.mxu0 0.0
      %742 = vmatpush1.msra.mxu0 0.0
      %743 = vmatprep.subr.mxu0 0.0
      %744 = vmatpush1.msra.mxu0 0.0
      %745 = vmatprep.subr.mxu0 0.0
      %746 = vmatpush1.msra.mxu0 0.0
      %747 = vmatprep.mubr.f32.mxu0 0.0
      %748 = vmatmul.mubr.f32.gmra.mrb[0].mxu0 %v678
      %v749 = vpop.f32.mrb[0].mxu0
      %v750 = vadd.f32 0.0, %v749
      %v751 = vpop.f32.mrb[0].mxu0
      %752 = vdwg.mxu0
      %v754 = vsel %vm469, %v675, 0
      %756 = vmatprep.subr.mxu0 0.0
      %757 = vmatpush1.msra.mxu0 %v754
      %758 = vmatprep.subr.mxu0 0.0
      %759 = vmatpush1.msra.mxu0 0.0
      %760 = vmatprep.subr.mxu0 0.0
      %761 = vmatpush1.msra.mxu0 0.0
      %762 = vmatprep.subr.mxu0 0.0
      %763 = vmatpush1.msra.mxu0 0.0
      %764 = vmatprep.subr.mxu0 0.0
      %765 = vmatpush1.msra.mxu0 0.0
      %766 = vmatprep.subr.mxu0 0.0
      %767 = vmatpush1.msra.mxu0 0.0
      %768 = vmatprep.subr.mxu0 0.0
      %769 = vmatpush1.msra.mxu0 0.0
      %770 = vmatprep.subr.mxu0 0.0
      %771 = vmatpush1.msra.mxu0 0.0
      %772 = vmatprep.subr.mxu0 0.0
      %773 = vmatpush1.msra.mxu0 0.0
      %774 = vmatprep.subr.mxu0 0.0
      %775 = vmatpush1.msra.mxu0 0.0
      %776 = vmatprep.subr.mxu0 0.0
      %777 = vmatpush1.msra.mxu0 0.0
      %778 = vmatprep.subr.mxu0 0.0
      %779 = vmatpush1.msra.mxu0 0.0
      %780 = vmatprep.subr.mxu0 0.0
      %781 = vmatpush1.msra.mxu0 0.0
      %782 = vmatprep.subr.mxu0 0.0
      %783 = vmatpush1.msra.mxu0 0.0
      %784 = vmatprep.subr.mxu0 0.0
      %785 = vmatpush1.msra.mxu0 0.0
      %786 = vmatprep.subr.mxu0 0.0
      %787 = vmatpush1.msra.mxu0 0.0
      %788 = vmatprep.subr.mxu0 0.0
      %789 = vmatpush1.msra.mxu0 0.0
      %790 = vmatprep.subr.mxu0 0.0
      %791 = vmatpush1.msra.mxu0 0.0
      %792 = vmatprep.subr.mxu0 0.0
      %793 = vmatpush1.msra.mxu0 0.0
      %794 = vmatprep.subr.mxu0 0.0
      %795 = vmatpush1.msra.mxu0 0.0
      %796 = vmatprep.subr.mxu0 0.0
      %797 = vmatpush1.msra.mxu0 0.0
      %798 = vmatprep.subr.mxu0 0.0
      %799 = vmatpush1.msra.mxu0 0.0
      %800 = vmatprep.subr.mxu0 0.0
      %801 = vmatpush1.msra.mxu0 0.0
      %802 = vmatprep.subr.mxu0 0.0
      %803 = vmatpush1.msra.mxu0 0.0
      %804 = vmatprep.subr.mxu0 0.0
      %805 = vmatpush1.msra.mxu0 0.0
      %806 = vmatprep.subr.mxu0 0.0
      %807 = vmatpush1.msra.mxu0 0.0
      %808 = vmatprep.subr.mxu0 0.0
      %809 = vmatpush1.msra.mxu0 0.0
      %810 = vmatprep.subr.mxu0 0.0
      %811 = vmatpush1.msra.mxu0 0.0
      %812 = vmatprep.subr.mxu0 0.0
      %813 = vmatpush1.msra.mxu0 0.0
      %814 = vmatprep.subr.mxu0 0.0
      %815 = vmatpush1.msra.mxu0 0.0
      %816 = vmatprep.subr.mxu0 0.0
      %817 = vmatpush1.msra.mxu0 0.0
      %818 = vmatprep.subr.mxu0 0.0
      %819 = vmatpush1.msra.mxu0 0.0
      %820 = vmatprep.mubr.f32.mxu0 0.0
      %821 = vmatmul.mubr.f32.gmra.mrb[0].mxu0 %v678
      %v822 = vpop.f32.mrb[0].mxu0
      %v823 = vadd.f32 0.0, %v822
      %v824 = vpop.f32.mrb[0].mxu0
      %825 = vdwg.mxu0
      %827 = vrot.lane.b32.xlu0 %v823, 1
      %v828 = vpop.permute.xlu0 %827
      %v830 = vmul.f32 %v459, %v828
      %832 = vrot.lane.b32.xlu0 %v830, 127
      %v833 = vpop.permute.xlu0 %832
      %v835 = vmul.f32 %v750, %v833
      %837 = vrot.lane.b32.xlu0 %v835, 2
      %v838 = vpop.permute.xlu0 %837
      %v840 = vsub.f32 %v459, %v838
      %841 = vset.pattern.permute.xlu0 1
      %842 = vperm.xlu0 %841, %v830
      %v843 = vpop.permute.xlu0 %842
      %v845 = vmul.f32 %v511, %v843
      %v846 = vmul.f32 %v513, %v843
      %848 = vset.pattern.permute.xlu0 2
      %849 = vperm.xlu0 %848, %v840
      %v850 = vpop.permute.xlu0 %849
      %v852 = vadd.f32 %v845, %v850
      %v853 = vadd.f32 %v846, %v850
      %v854 = vmax.f32 %v852, 0.0
      %v855 = vmax.f32 %v853, 0.0
      %856 = vrot.lane.b32.xlu0 %v854, 17
      %v857 = vpop.permute.xlu0 %856
      %858 = vrot.lane.b32.xlu0 %v855, 17
      %v859 = vpop.permute.xlu0 %858
      %v860 = vsel %vm262, %v857, %v859
      %v861 = vsel %vm262, %v859, %v857
      %v862 = vmul.f32 %v861, %v270
      %v863 = vmul.f32 %v860, %v274
      %864 = vrot.lane.b32.xlu0 %v854, 16
      %v865 = vpop.permute.xlu0 %864
      %866 = vrot.lane.b32.xlu0 %v855, 16
      %v867 = vpop.permute.xlu0 %866
      %v868 = vsel %vm283, %v865, %v867
      %v869 = vsel %vm283, %v867, %v865
      %v870 = vmul.f32 %v869, %v292
      %v871 = vmul.f32 %v868, %v296
      %872 = vrot.lane.b32.xlu0 %v854, 15
      %v873 = vpop.permute.xlu0 %872
      %874 = vrot.lane.b32.xlu0 %v855, 15
      %v875 = vpop.permute.xlu0 %874
      %v876 = vsel %vm305, %v873, %v875
      %v877 = vsel %vm305, %v875, %v873
      %v878 = vmul.f32 %v877, %v314
      %v879 = vmul.f32 %v876, %v318
      %880 = vrot.lane.b32.xlu0 %v854, 1
      %v881 = vpop.permute.xlu0 %880
      %882 = vrot.lane.b32.xlu0 %v855, 1
      %v883 = vpop.permute.xlu0 %882
      %v884 = vsel %vm327, %v881, %v883
      %v885 = vsel %vm327, %v883, %v881
      %v886 = vmul.f32 %v885, %v336
      %v887 = vmul.f32 %v884, %v340
      %v888 = vmul.f32 %v854, %v351
      %v889 = vmul.f32 %v855, %v355
      %890 = vrot.lane.b32.xlu0 %v854, 127
      %v891 = vpop.permute.xlu0 %890
      %892 = vrot.lane.b32.xlu0 %v855, 127
      %v893 = vpop.permute.xlu0 %892
      %v894 = vsel %vm364, %v891, %v893
      %v895 = vsel %vm364, %v893, %v891
      %v896 = vmul.f32 %v894, %v373
      %v897 = vmul.f32 %v895, %v377
      %898 = vrot.lane.b32.xlu0 %v854, 113
      %v899 = vpop.permute.xlu0 %898
      %900 = vrot.lane.b32.xlu0 %v855, 113
      %v901 = vpop.permute.xlu0 %900
      %v902 = vsel %vm386, %v899, %v901
      %v903 = vsel %vm386, %v901, %v899
      %v904 = vmul.f32 %v902, %v395
      %v905 = vmul.f32 %v903, %v399
      %906 = vrot.lane.b32.xlu0 %v854, 112
      %v907 = vpop.permute.xlu0 %906
      %908 = vrot.lane.b32.xlu0 %v855, 112
      %v909 = vpop.permute.xlu0 %908
      %v910 = vsel %vm408, %v907, %v909
      %v911 = vsel %vm408, %v909, %v907
      %v912 = vmul.f32 %v910, %v417
      %v913 = vmul.f32 %v911, %v421
      %914 = vrot.lane.b32.xlu0 %v854, 111
      %v915 = vpop.permute.xlu0 %914
      %916 = vrot.lane.b32.xlu0 %v855, 111
      %v917 = vpop.permute.xlu0 %916
      %v918 = vsel %vm430, %v915, %v917
      %v919 = vsel %vm430, %v917, %v915
      %v920 = vmul.f32 %v918, %v439
      %v921 = vmul.f32 %v919, %v443
      %v922 = vpack.c.bf16 %v870, %v862
      %v923 = vpack.c.bf16 %v871, %v863
      %v924 = vpack.c.bf16 %v886, %v878
      %v925 = vpack.c.bf16 %v887, %v879
      %v926 = vpack.c.bf16 %v896, %v888
      %v927 = vpack.c.bf16 %v897, %v889
      %v928 = vpack.c.bf16 %v912, %v904
      %v929 = vpack.c.bf16 %v913, %v905
      %v930 = vpack.c.bf16 %v920, %v920
      %v931 = vpack.c.bf16 %v921, %v921
      %s932 = scalar_lea.vmem %s2, 4
      %v933 = vld [vmem:[%s932] sm:$0xf]
      %s934 = scalar_lea.vmem %s3, 8
      %v935 = vld [vmem:[%s934] sm:$0xff]
      %937 = vset.pattern.permute.xlu0 0
      %938 = vperm.xlu0 %937, %v935
      %v939 = vpop.permute.xlu0 %938
      %v942 = vsel %vm465, %v933, 0
      %v945 = vsel %vm469, %v930, 0
      %v948 = vsel %vm469, %v931, 0
      %950 = vmatprep.subr.bf16.mxu0 %v923
      %951 = vmatpush1.bf16.msra.mxu0 %v922
      %952 = vmatprep.subr.bf16.mxu0 %v925
      %953 = vmatpush1.bf16.msra.mxu0 %v924
      %954 = vmatprep.subr.bf16.mxu0 %v927
      %955 = vmatpush1.bf16.msra.mxu0 %v926
      %956 = vmatprep.subr.bf16.mxu0 %v929
      %957 = vmatpush1.bf16.msra.mxu0 %v928
      %958 = vmatprep.subr.bf16.mxu0 %v948
      %959 = vmatpush1.bf16.msra.mxu0 %v945
      %960 = vmatprep.subr.bf16.mxu0 0
      %961 = vmatpush1.bf16.msra.mxu0 0
      %962 = vmatprep.subr.bf16.mxu0 0
      %963 = vmatpush1.bf16.msra.mxu0 0
      %964 = vmatprep.subr.bf16.mxu0 0
      %965 = vmatpush1.bf16.msra.mxu0 0
      %966 = vmatprep.subr.bf16.mxu0 0
      %967 = vmatpush1.bf16.msra.mxu0 0
      %968 = vmatprep.subr.bf16.mxu0 0
      %969 = vmatpush1.bf16.msra.mxu0 0
      %970 = vmatprep.subr.bf16.mxu0 0
      %971 = vmatpush1.bf16.msra.mxu0 0
      %972 = vmatprep.subr.bf16.mxu0 0
      %973 = vmatpush1.bf16.msra.mxu0 0
      %974 = vmatprep.subr.bf16.mxu0 0
      %975 = vmatpush1.bf16.msra.mxu0 0
      %976 = vmatprep.subr.bf16.mxu0 0
      %977 = vmatpush1.bf16.msra.mxu0 0
      %978 = vmatprep.subr.bf16.mxu0 0
      %979 = vmatpush1.bf16.msra.mxu0 0
      %980 = vmatprep.subr.bf16.mxu0 0
      %981 = vmatpush1.bf16.msra.mxu0 0
      %982 = vmatprep.mubr.bf16.mxu0 0
      %983 = vmatmul.mubr.bf16.gmra.mrb[0].mxu0 %v942
      %v984 = vpop.f32.mrb[0].mxu0
      %v985 = vadd.f32 %v939, %v984
      %v986 = vpop.f32.mrb[0].mxu0
      %v987 = vadd.f32 %v939, %v986
      %v988 = vpop.f32.mrb[0].mxu0
      %v989 = vpop.f32.mrb[0].mxu0
      %990 = vdwg.mxu0
      %v991 = vadd.f32 %v985, %v987
      %992 = vadd.xlane.f32.xlu0 %v991
      %v993 = vpop.xlane.xlu0 %992
      %v994 = vmul.f32 %v985, %v985
      %v995 = vmul.f32 %v987, %v987
      %v996 = vadd.f32 %v994, %v995
      %997 = vadd.xlane.f32.xlu0 %v996
      %v998 = vpop.xlane.xlu0 %997
      %s999 = scalar_lea.vmem %s4, 4
      %v1000 = vld [vmem:[%s999] sm:$0xf]
      %s1001 = scalar_lea.vmem %s5, 8
      %v1002 = vld [vmem:[%s1001] sm:$0xff]
      %v1004 = vsel %vm527, %v1000, 0
      %1006 = vmatprep.subr.mxu0 0.0
      %1007 = vmatpush1.msra.mxu0 %v993
      %1008 = vmatprep.subr.mxu0 0.0
      %1009 = vmatpush1.msra.mxu0 0.0
      %1010 = vmatprep.subr.mxu0 0.0
      %1011 = vmatpush1.msra.mxu0 0.0
      %1012 = vmatprep.subr.mxu0 0.0
      %1013 = vmatpush1.msra.mxu0 0.0
      %1014 = vmatprep.subr.mxu0 0.0
      %1015 = vmatpush1.msra.mxu0 0.0
      %1016 = vmatprep.subr.mxu0 0.0
      %1017 = vmatpush1.msra.mxu0 0.0
      %1018 = vmatprep.subr.mxu0 0.0
      %1019 = vmatpush1.msra.mxu0 0.0
      %1020 = vmatprep.subr.mxu0 0.0
      %1021 = vmatpush1.msra.mxu0 0.0
      %1022 = vmatprep.subr.mxu0 0.0
      %1023 = vmatpush1.msra.mxu0 0.0
      %1024 = vmatprep.subr.mxu0 0.0
      %1025 = vmatpush1.msra.mxu0 0.0
      %1026 = vmatprep.subr.mxu0 0.0
      %1027 = vmatpush1.msra.mxu0 0.0
      %1028 = vmatprep.subr.mxu0 0.0
      %1029 = vmatpush1.msra.mxu0 0.0
      %1030 = vmatprep.subr.mxu0 0.0
      %1031 = vmatpush1.msra.mxu0 0.0
      %1032 = vmatprep.subr.mxu0 0.0
      %1033 = vmatpush1.msra.mxu0 0.0
      %1034 = vmatprep.subr.mxu0 0.0
      %1035 = vmatpush1.msra.mxu0 0.0
      %1036 = vmatprep.subr.mxu0 0.0
      %1037 = vmatpush1.msra.mxu0 0.0
      %1038 = vmatprep.subr.mxu0 0.0
      %1039 = vmatpush1.msra.mxu0 0.0
      %1040 = vmatprep.subr.mxu0 0.0
      %1041 = vmatpush1.msra.mxu0 0.0
      %1042 = vmatprep.subr.mxu0 0.0
      %1043 = vmatpush1.msra.mxu0 0.0
      %1044 = vmatprep.subr.mxu0 0.0
      %1045 = vmatpush1.msra.mxu0 0.0
      %1046 = vmatprep.subr.mxu0 0.0
      %1047 = vmatpush1.msra.mxu0 0.0
      %1048 = vmatprep.subr.mxu0 0.0
      %1049 = vmatpush1.msra.mxu0 0.0
      %1050 = vmatprep.subr.mxu0 0.0
      %1051 = vmatpush1.msra.mxu0 0.0
      %1052 = vmatprep.subr.mxu0 0.0
      %1053 = vmatpush1.msra.mxu0 0.0
      %1054 = vmatprep.subr.mxu0 0.0
      %1055 = vmatpush1.msra.mxu0 0.0
      %1056 = vmatprep.subr.mxu0 0.0
      %1057 = vmatpush1.msra.mxu0 0.0
      %1058 = vmatprep.subr.mxu0 0.0
      %1059 = vmatpush1.msra.mxu0 0.0
      %1060 = vmatprep.subr.mxu0 0.0
      %1061 = vmatpush1.msra.mxu0 0.0
      %1062 = vmatprep.subr.mxu0 0.0
      %1063 = vmatpush1.msra.mxu0 0.0
      %1064 = vmatprep.subr.mxu0 0.0
      %1065 = vmatpush1.msra.mxu0 0.0
      %1066 = vmatprep.subr.mxu0 0.0
      %1067 = vmatpush1.msra.mxu0 0.0
      %1068 = vmatprep.subr.mxu0 0.0
      %1069 = vmatpush1.msra.mxu0 0.0
      %1070 = vmatprep.mubr.f32.mxu0 0.0
      %1071 = vmatmul.mubr.f32.gmra.mrb[0].mxu0 %v1004
      %v1072 = vpop.f32.mrb[0].mxu0
      %v1073 = vadd.f32 0.0, %v1072
      %v1074 = vpop.f32.mrb[0].mxu0
      %1075 = vdwg.mxu0
      %1076 = vmatprep.subr.mxu0 0.0
      %1077 = vmatpush1.msra.mxu0 %v998
      %1078 = vmatprep.subr.mxu0 0.0
      %1079 = vmatpush1.msra.mxu0 0.0
      %1080 = vmatprep.subr.mxu0 0.0
      %1081 = vmatpush1.msra.mxu0 0.0
      %1082 = vmatprep.subr.mxu0 0.0
      %1083 = vmatpush1.msra.mxu0 0.0
      %1084 = vmatprep.subr.mxu0 0.0
      %1085 = vmatpush1.msra.mxu0 0.0
      %1086 = vmatprep.subr.mxu0 0.0
      %1087 = vmatpush1.msra.mxu0 0.0
      %1088 = vmatprep.subr.mxu0 0.0
      %1089 = vmatpush1.msra.mxu0 0.0
      %1090 = vmatprep.subr.mxu0 0.0
      %1091 = vmatpush1.msra.mxu0 0.0
      %1092 = vmatprep.subr.mxu0 0.0
      %1093 = vmatpush1.msra.mxu0 0.0
      %1094 = vmatprep.subr.mxu0 0.0
      %1095 = vmatpush1.msra.mxu0 0.0
      %1096 = vmatprep.subr.mxu0 0.0
      %1097 = vmatpush1.msra.mxu0 0.0
      %1098 = vmatprep.subr.mxu0 0.0
      %1099 = vmatpush1.msra.mxu0 0.0
      %1100 = vmatprep.subr.mxu0 0.0
      %1101 = vmatpush1.msra.mxu0 0.0
      %1102 = vmatprep.subr.mxu0 0.0
      %1103 = vmatpush1.msra.mxu0 0.0
      %1104 = vmatprep.subr.mxu0 0.0
      %1105 = vmatpush1.msra.mxu0 0.0
      %1106 = vmatprep.subr.mxu0 0.0
      %1107 = vmatpush1.msra.mxu0 0.0
      %1108 = vmatprep.subr.mxu0 0.0
      %1109 = vmatpush1.msra.mxu0 0.0
      %1110 = vmatprep.subr.mxu0 0.0
      %1111 = vmatpush1.msra.mxu0 0.0
      %1112 = vmatprep.subr.mxu0 0.0
      %1113 = vmatpush1.msra.mxu0 0.0
      %1114 = vmatprep.subr.mxu0 0.0
      %1115 = vmatpush1.msra.mxu0 0.0
      %1116 = vmatprep.subr.mxu0 0.0
      %1117 = vmatpush1.msra.mxu0 0.0
      %1118 = vmatprep.subr.mxu0 0.0
      %1119 = vmatpush1.msra.mxu0 0.0
      %1120 = vmatprep.subr.mxu0 0.0
      %1121 = vmatpush1.msra.mxu0 0.0
      %1122 = vmatprep.subr.mxu0 0.0
      %1123 = vmatpush1.msra.mxu0 0.0
      %1124 = vmatprep.subr.mxu0 0.0
      %1125 = vmatpush1.msra.mxu0 0.0
      %1126 = vmatprep.subr.mxu0 0.0
      %1127 = vmatpush1.msra.mxu0 0.0
      %1128 = vmatprep.subr.mxu0 0.0
      %1129 = vmatpush1.msra.mxu0 0.0
      %1130 = vmatprep.subr.mxu0 0.0
      %1131 = vmatpush1.msra.mxu0 0.0
      %1132 = vmatprep.subr.mxu0 0.0
      %1133 = vmatpush1.msra.mxu0 0.0
      %1134 = vmatprep.subr.mxu0 0.0
      %1135 = vmatpush1.msra.mxu0 0.0
      %1136 = vmatprep.subr.mxu0 0.0
      %1137 = vmatpush1.msra.mxu0 0.0
      %1138 = vmatprep.subr.mxu0 0.0
      %1139 = vmatpush1.msra.mxu0 0.0
      %1140 = vmatprep.mubr.f32.mxu0 0.0
      %1141 = vmatmul.mubr.f32.gmra.mrb[0].mxu0 %v1004
      %v1142 = vpop.f32.mrb[0].mxu0
      %v1143 = vadd.f32 0.0, %v1142
      %v1144 = vpop.f32.mrb[0].mxu0
      %1145 = vdwg.mxu0
      %v1146 = vmul.f32 %v1073, %v1073
      %v1147 = vsub.f32 %v1143, %v1146
      %v1148 = vmax.f32 %v1147, 0.0
      %v1149 = vadd.f32 %v1148, 1e-05
      %v1150 = vrsqrt.pop %v1149
      %v1152 = vsel %vm676, %v1002, 0
      %v1155 = vsel %vm469, %v1073, 0
      %1157 = vmatprep.subr.mxu0 0.0
      %1158 = vmatpush1.msra.mxu0 %v1155
      %1159 = vmatprep.subr.mxu0 0.0
      %1160 = vmatpush1.msra.mxu0 0.0
      %1161 = vmatprep.subr.mxu0 0.0
      %1162 = vmatpush1.msra.mxu0 0.0
      %1163 = vmatprep.subr.mxu0 0.0
      %1164 = vmatpush1.msra.mxu0 0.0
      %1165 = vmatprep.subr.mxu0 0.0
      %1166 = vmatpush1.msra.mxu0 0.0
      %1167 = vmatprep.subr.mxu0 0.0
      %1168 = vmatpush1.msra.mxu0 0.0
      %1169 = vmatprep.subr.mxu0 0.0
      %1170 = vmatpush1.msra.mxu0 0.0
      %1171 = vmatprep.subr.mxu0 0.0
      %1172 = vmatpush1.msra.mxu0 0.0
      %1173 = vmatprep.subr.mxu0 0.0
      %1174 = vmatpush1.msra.mxu0 0.0
      %1175 = vmatprep.subr.mxu0 0.0
      %1176 = vmatpush1.msra.mxu0 0.0
      %1177 = vmatprep.subr.mxu0 0.0
      %1178 = vmatpush1.msra.mxu0 0.0
      %1179 = vmatprep.subr.mxu0 0.0
      %1180 = vmatpush1.msra.mxu0 0.0
      %1181 = vmatprep.subr.mxu0 0.0
      %1182 = vmatpush1.msra.mxu0 0.0
      %1183 = vmatprep.subr.mxu0 0.0
      %1184 = vmatpush1.msra.mxu0 0.0
      %1185 = vmatprep.subr.mxu0 0.0
      %1186 = vmatpush1.msra.mxu0 0.0
      %1187 = vmatprep.subr.mxu0 0.0
      %1188 = vmatpush1.msra.mxu0 0.0
      %1189 = vmatprep.subr.mxu0 0.0
      %1190 = vmatpush1.msra.mxu0 0.0
      %1191 = vmatprep.subr.mxu0 0.0
      %1192 = vmatpush1.msra.mxu0 0.0
      %1193 = vmatprep.subr.mxu0 0.0
      %1194 = vmatpush1.msra.mxu0 0.0
      %1195 = vmatprep.subr.mxu0 0.0
      %1196 = vmatpush1.msra.mxu0 0.0
      %1197 = vmatprep.subr.mxu0 0.0
      %1198 = vmatpush1.msra.mxu0 0.0
      %1199 = vmatprep.subr.mxu0 0.0
      %1200 = vmatpush1.msra.mxu0 0.0
      %1201 = vmatprep.subr.mxu0 0.0
      %1202 = vmatpush1.msra.mxu0 0.0
      %1203 = vmatprep.subr.mxu0 0.0
      %1204 = vmatpush1.msra.mxu0 0.0
      %1205 = vmatprep.subr.mxu0 0.0
      %1206 = vmatpush1.msra.mxu0 0.0
      %1207 = vmatprep.subr.mxu0 0.0
      %1208 = vmatpush1.msra.mxu0 0.0
      %1209 = vmatprep.subr.mxu0 0.0
      %1210 = vmatpush1.msra.mxu0 0.0
      %1211 = vmatprep.subr.mxu0 0.0
      %1212 = vmatpush1.msra.mxu0 0.0
      %1213 = vmatprep.subr.mxu0 0.0
      %1214 = vmatpush1.msra.mxu0 0.0
      %1215 = vmatprep.subr.mxu0 0.0
      %1216 = vmatpush1.msra.mxu0 0.0
      %1217 = vmatprep.subr.mxu0 0.0
      %1218 = vmatpush1.msra.mxu0 0.0
      %1219 = vmatprep.subr.mxu0 0.0
      %1220 = vmatpush1.msra.mxu0 0.0
      %1221 = vmatprep.mubr.f32.mxu0 0.0
      %1222 = vmatmul.mubr.f32.gmra.mrb[0].mxu0 %v1152
      %v1223 = vpop.f32.mrb[0].mxu0
      %v1224 = vadd.f32 0.0, %v1223
      %v1225 = vpop.f32.mrb[0].mxu0
      %1226 = vdwg.mxu0
      %v1228 = vsel %vm469, %v1150, 0
      %1230 = vmatprep.subr.mxu0 0.0
      %1231 = vmatpush1.msra.mxu0 %v1228
      %1232 = vmatprep.subr.mxu0 0.0
      %1233 = vmatpush1.msra.mxu0 0.0
      %1234 = vmatprep.subr.mxu0 0.0
      %1235 = vmatpush1.msra.mxu0 0.0
      %1236 = vmatprep.subr.mxu0 0.0
      %1237 = vmatpush1.msra.mxu0 0.0
      %1238 = vmatprep.subr.mxu0 0.0
      %1239 = vmatpush1.msra.mxu0 0.0
      %1240 = vmatprep.subr.mxu0 0.0
      %1241 = vmatpush1.msra.mxu0 0.0
      %1242 = vmatprep.subr.mxu0 0.0
      %1243 = vmatpush1.msra.mxu0 0.0
      %1244 = vmatprep.subr.mxu0 0.0
      %1245 = vmatpush1.msra.mxu0 0.0
      %1246 = vmatprep.subr.mxu0 0.0
      %1247 = vmatpush1.msra.mxu0 0.0
      %1248 = vmatprep.subr.mxu0 0.0
      %1249 = vmatpush1.msra.mxu0 0.0
      %1250 = vmatprep.subr.mxu0 0.0
      %1251 = vmatpush1.msra.mxu0 0.0
      %1252 = vmatprep.subr.mxu0 0.0
      %1253 = vmatpush1.msra.mxu0 0.0
      %1254 = vmatprep.subr.mxu0 0.0
      %1255 = vmatpush1.msra.mxu0 0.0
      %1256 = vmatprep.subr.mxu0 0.0
      %1257 = vmatpush1.msra.mxu0 0.0
      %1258 = vmatprep.subr.mxu0 0.0
      %1259 = vmatpush1.msra.mxu0 0.0
      %1260 = vmatprep.subr.mxu0 0.0
      %1261 = vmatpush1.msra.mxu0 0.0
      %1262 = vmatprep.subr.mxu0 0.0
      %1263 = vmatpush1.msra.mxu0 0.0
      %1264 = vmatprep.subr.mxu0 0.0
      %1265 = vmatpush1.msra.mxu0 0.0
      %1266 = vmatprep.subr.mxu0 0.0
      %1267 = vmatpush1.msra.mxu0 0.0
      %1268 = vmatprep.subr.mxu0 0.0
      %1269 = vmatpush1.msra.mxu0 0.0
      %1270 = vmatprep.subr.mxu0 0.0
      %1271 = vmatpush1.msra.mxu0 0.0
      %1272 = vmatprep.subr.mxu0 0.0
      %1273 = vmatpush1.msra.mxu0 0.0
      %1274 = vmatprep.subr.mxu0 0.0
      %1275 = vmatpush1.msra.mxu0 0.0
      %1276 = vmatprep.subr.mxu0 0.0
      %1277 = vmatpush1.msra.mxu0 0.0
      %1278 = vmatprep.subr.mxu0 0.0
      %1279 = vmatpush1.msra.mxu0 0.0
      %1280 = vmatprep.subr.mxu0 0.0
      %1281 = vmatpush1.msra.mxu0 0.0
      %1282 = vmatprep.subr.mxu0 0.0
      %1283 = vmatpush1.msra.mxu0 0.0
      %1284 = vmatprep.subr.mxu0 0.0
      %1285 = vmatpush1.msra.mxu0 0.0
      %1286 = vmatprep.subr.mxu0 0.0
      %1287 = vmatpush1.msra.mxu0 0.0
      %1288 = vmatprep.subr.mxu0 0.0
      %1289 = vmatpush1.msra.mxu0 0.0
      %1290 = vmatprep.subr.mxu0 0.0
      %1291 = vmatpush1.msra.mxu0 0.0
      %1292 = vmatprep.subr.mxu0 0.0
      %1293 = vmatpush1.msra.mxu0 0.0
      %1294 = vmatprep.mubr.f32.mxu0 0.0
      %1295 = vmatmul.mubr.f32.gmra.mrb[0].mxu0 %v1152
      %v1296 = vpop.f32.mrb[0].mxu0
      %v1297 = vadd.f32 0.0, %v1296
      %v1298 = vpop.f32.mrb[0].mxu0
      %1299 = vdwg.mxu0
      %1301 = vrot.lane.b32.xlu0 %v1297, 1
      %v1302 = vpop.permute.xlu0 %1301
      %v1304 = vmul.f32 %v935, %v1302
      %1306 = vrot.lane.b32.xlu0 %v1304, 127
      %v1307 = vpop.permute.xlu0 %1306
      %v1309 = vmul.f32 %v1224, %v1307
      %1311 = vrot.lane.b32.xlu0 %v1309, 2
      %v1312 = vpop.permute.xlu0 %1311
      %v1314 = vsub.f32 %v935, %v1312
      %1315 = vset.pattern.permute.xlu0 1
      %1316 = vperm.xlu0 %1315, %v1304
      %v1317 = vpop.permute.xlu0 %1316
      %v1319 = vmul.f32 %v985, %v1317
      %v1320 = vmul.f32 %v987, %v1317
      %1322 = vset.pattern.permute.xlu0 2
      %1323 = vperm.xlu0 %1322, %v1314
      %v1324 = vpop.permute.xlu0 %1323
      %v1326 = vadd.f32 %v1319, %v1324
      %v1327 = vadd.f32 %v1320, %v1324
      %v1328 = vmax.f32 %v1326, 0.0
      %v1329 = vmax.f32 %v1327, 0.0
      %v1330 = vadd.f32 %v1328, %v254
      %v1331 = vadd.f32 %v1329, %v255
      %1332 = vrot.lane.b32.xlu0 %v1330, 17
      %v1333 = vpop.permute.xlu0 %1332
      %1334 = vrot.lane.b32.xlu0 %v1331, 17
      %v1335 = vpop.permute.xlu0 %1334
      %v1336 = vsel %vm262, %v1333, %v1335
      %v1337 = vsel %vm262, %v1335, %v1333
      %v1338 = vmul.f32 %v1337, %v270
      %v1339 = vmul.f32 %v1336, %v274
      %1340 = vrot.lane.b32.xlu0 %v1330, 16
      %v1341 = vpop.permute.xlu0 %1340
      %1342 = vrot.lane.b32.xlu0 %v1331, 16
      %v1343 = vpop.permute.xlu0 %1342
      %v1344 = vsel %vm283, %v1341, %v1343
      %v1345 = vsel %vm283, %v1343, %v1341
      %v1346 = vmul.f32 %v1345, %v292
      %v1347 = vmul.f32 %v1344, %v296
      %1348 = vrot.lane.b32.xlu0 %v1330, 15
      %v1349 = vpop.permute.xlu0 %1348
      %1350 = vrot.lane.b32.xlu0 %v1331, 15
      %v1351 = vpop.permute.xlu0 %1350
      %v1352 = vsel %vm305, %v1349, %v1351
      %v1353 = vsel %vm305, %v1351, %v1349
      %v1354 = vmul.f32 %v1353, %v314
      %v1355 = vmul.f32 %v1352, %v318
      %1356 = vrot.lane.b32.xlu0 %v1330, 1
      %v1357 = vpop.permute.xlu0 %1356
      %1358 = vrot.lane.b32.xlu0 %v1331, 1
      %v1359 = vpop.permute.xlu0 %1358
      %v1360 = vsel %vm327, %v1357, %v1359
      %v1361 = vsel %vm327, %v1359, %v1357
      %v1362 = vmul.f32 %v1361, %v336
      %v1363 = vmul.f32 %v1360, %v340
      %v1364 = vmul.f32 %v1330, %v351
      %v1365 = vmul.f32 %v1331, %v355
      %1366 = vrot.lane.b32.xlu0 %v1330, 127
      %v1367 = vpop.permute.xlu0 %1366
      %1368 = vrot.lane.b32.xlu0 %v1331, 127
      %v1369 = vpop.permute.xlu0 %1368
      %v1370 = vsel %vm364, %v1367, %v1369
      %v1371 = vsel %vm364, %v1369, %v1367
      %v1372 = vmul.f32 %v1370, %v373
      %v1373 = vmul.f32 %v1371, %v377
      %1374 = vrot.lane.b32.xlu0 %v1330, 113
      %v1375 = vpop.permute.xlu0 %1374
      %1376 = vrot.lane.b32.xlu0 %v1331, 113
      %v1377 = vpop.permute.xlu0 %1376
      %v1378 = vsel %vm386, %v1375, %v1377
      %v1379 = vsel %vm386, %v1377, %v1375
      %v1380 = vmul.f32 %v1378, %v395
      %v1381 = vmul.f32 %v1379, %v399
      %1382 = vrot.lane.b32.xlu0 %v1330, 112
      %v1383 = vpop.permute.xlu0 %1382
      %1384 = vrot.lane.b32.xlu0 %v1331, 112
      %v1385 = vpop.permute.xlu0 %1384
      %v1386 = vsel %vm408, %v1383, %v1385
      %v1387 = vsel %vm408, %v1385, %v1383
      %v1388 = vmul.f32 %v1386, %v417
      %v1389 = vmul.f32 %v1387, %v421
      %1390 = vrot.lane.b32.xlu0 %v1330, 111
      %v1391 = vpop.permute.xlu0 %1390
      %1392 = vrot.lane.b32.xlu0 %v1331, 111
      %v1393 = vpop.permute.xlu0 %1392
      %v1394 = vsel %vm430, %v1391, %v1393
      %v1395 = vsel %vm430, %v1393, %v1391
      %v1396 = vmul.f32 %v1394, %v439
      %v1397 = vmul.f32 %v1395, %v443
      %v1398 = vpack.c.bf16 %v1346, %v1338
      %v1399 = vpack.c.bf16 %v1347, %v1339
      %v1400 = vpack.c.bf16 %v1362, %v1354
      %v1401 = vpack.c.bf16 %v1363, %v1355
      %v1402 = vpack.c.bf16 %v1372, %v1364
      %v1403 = vpack.c.bf16 %v1373, %v1365
      %v1404 = vpack.c.bf16 %v1388, %v1380
      %v1405 = vpack.c.bf16 %v1389, %v1381
      %v1406 = vpack.c.bf16 %v1396, %v1396
      %v1407 = vpack.c.bf16 %v1397, %v1397
      %s1408 = scalar_lea.vmem %s2, 8
      %v1409 = vld [vmem:[%s1408] sm:$0xf]
      %s1410 = scalar_lea.vmem %s3, 16
      %v1411 = vld [vmem:[%s1410] sm:$0xff]
      %1413 = vset.pattern.permute.xlu0 0
      %1414 = vperm.xlu0 %1413, %v1411
      %v1415 = vpop.permute.xlu0 %1414
      %v1418 = vsel %vm465, %v1409, 0
      %v1421 = vsel %vm469, %v1406, 0
      %v1424 = vsel %vm469, %v1407, 0
      %1426 = vmatprep.subr.bf16.mxu0 %v1399
      %1427 = vmatpush1.bf16.msra.mxu0 %v1398
      %1428 = vmatprep.subr.bf16.mxu0 %v1401
      %1429 = vmatpush1.bf16.msra.mxu0 %v1400
      %1430 = vmatprep.subr.bf16.mxu0 %v1403
      %1431 = vmatpush1.bf16.msra.mxu0 %v1402
      %1432 = vmatprep.subr.bf16.mxu0 %v1405
      %1433 = vmatpush1.bf16.msra.mxu0 %v1404
      %1434 = vmatprep.subr.bf16.mxu0 %v1424
      %1435 = vmatpush1.bf16.msra.mxu0 %v1421
      %1436 = vmatprep.subr.bf16.mxu0 0
      %1437 = vmatpush1.bf16.msra.mxu0 0
      %1438 = vmatprep.subr.bf16.mxu0 0
      %1439 = vmatpush1.bf16.msra.mxu0 0
      %1440 = vmatprep.subr.bf16.mxu0 0
      %1441 = vmatpush1.bf16.msra.mxu0 0
      %1442 = vmatprep.subr.bf16.mxu0 0
      %1443 = vmatpush1.bf16.msra.mxu0 0
      %1444 = vmatprep.subr.bf16.mxu0 0
      %1445 = vmatpush1.bf16.msra.mxu0 0
      %1446 = vmatprep.subr.bf16.mxu0 0
      %1447 = vmatpush1.bf16.msra.mxu0 0
      %1448 = vmatprep.subr.bf16.mxu0 0
      %1449 = vmatpush1.bf16.msra.mxu0 0
      %1450 = vmatprep.subr.bf16.mxu0 0
      %1451 = vmatpush1.bf16.msra.mxu0 0
      %1452 = vmatprep.subr.bf16.mxu0 0
      %1453 = vmatpush1.bf16.msra.mxu0 0
      %1454 = vmatprep.subr.bf16.mxu0 0
      %1455 = vmatpush1.bf16.msra.mxu0 0
      %1456 = vmatprep.subr.bf16.mxu0 0
      %1457 = vmatpush1.bf16.msra.mxu0 0
      %1458 = vmatprep.mubr.bf16.mxu0 0
      %1459 = vmatmul.mubr.bf16.gmra.mrb[0].mxu0 %v1418
      %v1460 = vpop.f32.mrb[0].mxu0
      %v1461 = vadd.f32 %v1415, %v1460
      %v1462 = vpop.f32.mrb[0].mxu0
      %v1463 = vadd.f32 %v1415, %v1462
      %v1464 = vpop.f32.mrb[0].mxu0
      %v1465 = vpop.f32.mrb[0].mxu0
      %1466 = vdwg.mxu0
      %v1467 = vadd.f32 %v1461, %v1463
      %1468 = vadd.xlane.f32.xlu0 %v1467
      %v1469 = vpop.xlane.xlu0 %1468
      %v1470 = vmul.f32 %v1461, %v1461
      %v1471 = vmul.f32 %v1463, %v1463
      %v1472 = vadd.f32 %v1470, %v1471
      %1473 = vadd.xlane.f32.xlu0 %v1472
      %v1474 = vpop.xlane.xlu0 %1473
      %s1475 = scalar_lea.vmem %s4, 8
      %v1476 = vld [vmem:[%s1475] sm:$0xf]
      %s1477 = scalar_lea.vmem %s5, 16
      %v1478 = vld [vmem:[%s1477] sm:$0xff]
      %v1480 = vsel %vm527, %v1476, 0
      %1482 = vmatprep.subr.mxu0 0.0
      %1483 = vmatpush1.msra.mxu0 %v1469
      %1484 = vmatprep.subr.mxu0 0.0
      %1485 = vmatpush1.msra.mxu0 0.0
      %1486 = vmatprep.subr.mxu0 0.0
      %1487 = vmatpush1.msra.mxu0 0.0
      %1488 = vmatprep.subr.mxu0 0.0
      %1489 = vmatpush1.msra.mxu0 0.0
      %1490 = vmatprep.subr.mxu0 0.0
      %1491 = vmatpush1.msra.mxu0 0.0
      %1492 = vmatprep.subr.mxu0 0.0
      %1493 = vmatpush1.msra.mxu0 0.0
      %1494 = vmatprep.subr.mxu0 0.0
      %1495 = vmatpush1.msra.mxu0 0.0
      %1496 = vmatprep.subr.mxu0 0.0
      %1497 = vmatpush1.msra.mxu0 0.0
      %1498 = vmatprep.subr.mxu0 0.0
      %1499 = vmatpush1.msra.mxu0 0.0
      %1500 = vmatprep.subr.mxu0 0.0
      %1501 = vmatpush1.msra.mxu0 0.0
      %1502 = vmatprep.subr.mxu0 0.0
      %1503 = vmatpush1.msra.mxu0 0.0
      %1504 = vmatprep.subr.mxu0 0.0
      %1505 = vmatpush1.msra.mxu0 0.0
      %1506 = vmatprep.subr.mxu0 0.0
      %1507 = vmatpush1.msra.mxu0 0.0
      %1508 = vmatprep.subr.mxu0 0.0
      %1509 = vmatpush1.msra.mxu0 0.0
      %1510 = vmatprep.subr.mxu0 0.0
      %1511 = vmatpush1.msra.mxu0 0.0
      %1512 = vmatprep.subr.mxu0 0.0
      %1513 = vmatpush1.msra.mxu0 0.0
      %1514 = vmatprep.subr.mxu0 0.0
      %1515 = vmatpush1.msra.mxu0 0.0
      %1516 = vmatprep.subr.mxu0 0.0
      %1517 = vmatpush1.msra.mxu0 0.0
      %1518 = vmatprep.subr.mxu0 0.0
      %1519 = vmatpush1.msra.mxu0 0.0
      %1520 = vmatprep.subr.mxu0 0.0
      %1521 = vmatpush1.msra.mxu0 0.0
      %1522 = vmatprep.subr.mxu0 0.0
      %1523 = vmatpush1.msra.mxu0 0.0
      %1524 = vmatprep.subr.mxu0 0.0
      %1525 = vmatpush1.msra.mxu0 0.0
      %1526 = vmatprep.subr.mxu0 0.0
      %1527 = vmatpush1.msra.mxu0 0.0
      %1528 = vmatprep.subr.mxu0 0.0
      %1529 = vmatpush1.msra.mxu0 0.0
      %1530 = vmatprep.subr.mxu0 0.0
      %1531 = vmatpush1.msra.mxu0 0.0
      %1532 = vmatprep.subr.mxu0 0.0
      %1533 = vmatpush1.msra.mxu0 0.0
      %1534 = vmatprep.subr.mxu0 0.0
      %1535 = vmatpush1.msra.mxu0 0.0
      %1536 = vmatprep.subr.mxu0 0.0
      %1537 = vmatpush1.msra.mxu0 0.0
      %1538 = vmatprep.subr.mxu0 0.0
      %1539 = vmatpush1.msra.mxu0 0.0
      %1540 = vmatprep.subr.mxu0 0.0
      %1541 = vmatpush1.msra.mxu0 0.0
      %1542 = vmatprep.subr.mxu0 0.0
      %1543 = vmatpush1.msra.mxu0 0.0
      %1544 = vmatprep.subr.mxu0 0.0
      %1545 = vmatpush1.msra.mxu0 0.0
      %1546 = vmatprep.mubr.f32.mxu0 0.0
      %1547 = vmatmul.mubr.f32.gmra.mrb[0].mxu0 %v1480
      %v1548 = vpop.f32.mrb[0].mxu0
      %v1549 = vadd.f32 0.0, %v1548
      %v1550 = vpop.f32.mrb[0].mxu0
      %1551 = vdwg.mxu0
      %1552 = vmatprep.subr.mxu0 0.0
      %1553 = vmatpush1.msra.mxu0 %v1474
      %1554 = vmatprep.subr.mxu0 0.0
      %1555 = vmatpush1.msra.mxu0 0.0
      %1556 = vmatprep.subr.mxu0 0.0
      %1557 = vmatpush1.msra.mxu0 0.0
      %1558 = vmatprep.subr.mxu0 0.0
      %1559 = vmatpush1.msra.mxu0 0.0
      %1560 = vmatprep.subr.mxu0 0.0
      %1561 = vmatpush1.msra.mxu0 0.0
      %1562 = vmatprep.subr.mxu0 0.0
      %1563 = vmatpush1.msra.mxu0 0.0
      %1564 = vmatprep.subr.mxu0 0.0
      %1565 = vmatpush1.msra.mxu0 0.0
      %1566 = vmatprep.subr.mxu0 0.0
      %1567 = vmatpush1.msra.mxu0 0.0
      %1568 = vmatprep.subr.mxu0 0.0
      %1569 = vmatpush1.msra.mxu0 0.0
      %1570 = vmatprep.subr.mxu0 0.0
      %1571 = vmatpush1.msra.mxu0 0.0
      %1572 = vmatprep.subr.mxu0 0.0
      %1573 = vmatpush1.msra.mxu0 0.0
      %1574 = vmatprep.subr.mxu0 0.0
      %1575 = vmatpush1.msra.mxu0 0.0
      %1576 = vmatprep.subr.mxu0 0.0
      %1577 = vmatpush1.msra.mxu0 0.0
      %1578 = vmatprep.subr.mxu0 0.0
      %1579 = vmatpush1.msra.mxu0 0.0
      %1580 = vmatprep.subr.mxu0 0.0
      %1581 = vmatpush1.msra.mxu0 0.0
      %1582 = vmatprep.subr.mxu0 0.0
      %1583 = vmatpush1.msra.mxu0 0.0
      %1584 = vmatprep.subr.mxu0 0.0
      %1585 = vmatpush1.msra.mxu0 0.0
      %1586 = vmatprep.subr.mxu0 0.0
      %1587 = vmatpush1.msra.mxu0 0.0
      %1588 = vmatprep.subr.mxu0 0.0
      %1589 = vmatpush1.msra.mxu0 0.0
      %1590 = vmatprep.subr.mxu0 0.0
      %1591 = vmatpush1.msra.mxu0 0.0
      %1592 = vmatprep.subr.mxu0 0.0
      %1593 = vmatpush1.msra.mxu0 0.0
      %1594 = vmatprep.subr.mxu0 0.0
      %1595 = vmatpush1.msra.mxu0 0.0
      %1596 = vmatprep.subr.mxu0 0.0
      %1597 = vmatpush1.msra.mxu0 0.0
      %1598 = vmatprep.subr.mxu0 0.0
      %1599 = vmatpush1.msra.mxu0 0.0
      %1600 = vmatprep.subr.mxu0 0.0
      %1601 = vmatpush1.msra.mxu0 0.0
      %1602 = vmatprep.subr.mxu0 0.0
      %1603 = vmatpush1.msra.mxu0 0.0
      %1604 = vmatprep.subr.mxu0 0.0
      %1605 = vmatpush1.msra.mxu0 0.0
      %1606 = vmatprep.subr.mxu0 0.0
      %1607 = vmatpush1.msra.mxu0 0.0
      %1608 = vmatprep.subr.mxu0 0.0
      %1609 = vmatpush1.msra.mxu0 0.0
      %1610 = vmatprep.subr.mxu0 0.0
      %1611 = vmatpush1.msra.mxu0 0.0
      %1612 = vmatprep.subr.mxu0 0.0
      %1613 = vmatpush1.msra.mxu0 0.0
      %1614 = vmatprep.subr.mxu0 0.0
      %1615 = vmatpush1.msra.mxu0 0.0
      %1616 = vmatprep.mubr.f32.mxu0 0.0
      %1617 = vmatmul.mubr.f32.gmra.mrb[0].mxu0 %v1480
      %v1618 = vpop.f32.mrb[0].mxu0
      %v1619 = vadd.f32 0.0, %v1618
      %v1620 = vpop.f32.mrb[0].mxu0
      %1621 = vdwg.mxu0
      %v1622 = vmul.f32 %v1549, %v1549
      %v1623 = vsub.f32 %v1619, %v1622
      %v1624 = vmax.f32 %v1623, 0.0
      %v1625 = vadd.f32 %v1624, 1e-05
      %v1626 = vrsqrt.pop %v1625
      %v1628 = vsel %vm676, %v1478, 0
      %v1631 = vsel %vm469, %v1549, 0
      %1633 = vmatprep.subr.mxu0 0.0
      %1634 = vmatpush1.msra.mxu0 %v1631
      %1635 = vmatprep.subr.mxu0 0.0
      %1636 = vmatpush1.msra.mxu0 0.0
      %1637 = vmatprep.subr.mxu0 0.0
      %1638 = vmatpush1.msra.mxu0 0.0
      %1639 = vmatprep.subr.mxu0 0.0
      %1640 = vmatpush1.msra.mxu0 0.0
      %1641 = vmatprep.subr.mxu0 0.0
      %1642 = vmatpush1.msra.mxu0 0.0
      %1643 = vmatprep.subr.mxu0 0.0
      %1644 = vmatpush1.msra.mxu0 0.0
      %1645 = vmatprep.subr.mxu0 0.0
      %1646 = vmatpush1.msra.mxu0 0.0
      %1647 = vmatprep.subr.mxu0 0.0
      %1648 = vmatpush1.msra.mxu0 0.0
      %1649 = vmatprep.subr.mxu0 0.0
      %1650 = vmatpush1.msra.mxu0 0.0
      %1651 = vmatprep.subr.mxu0 0.0
      %1652 = vmatpush1.msra.mxu0 0.0
      %1653 = vmatprep.subr.mxu0 0.0
      %1654 = vmatpush1.msra.mxu0 0.0
      %1655 = vmatprep.subr.mxu0 0.0
      %1656 = vmatpush1.msra.mxu0 0.0
      %1657 = vmatprep.subr.mxu0 0.0
      %1658 = vmatpush1.msra.mxu0 0.0
      %1659 = vmatprep.subr.mxu0 0.0
      %1660 = vmatpush1.msra.mxu0 0.0
      %1661 = vmatprep.subr.mxu0 0.0
      %1662 = vmatpush1.msra.mxu0 0.0
      %1663 = vmatprep.subr.mxu0 0.0
      %1664 = vmatpush1.msra.mxu0 0.0
      %1665 = vmatprep.subr.mxu0 0.0
      %1666 = vmatpush1.msra.mxu0 0.0
      %1667 = vmatprep.subr.mxu0 0.0
      %1668 = vmatpush1.msra.mxu0 0.0
      %1669 = vmatprep.subr.mxu0 0.0
      %1670 = vmatpush1.msra.mxu0 0.0
      %1671 = vmatprep.subr.mxu0 0.0
      %1672 = vmatpush1.msra.mxu0 0.0
      %1673 = vmatprep.subr.mxu0 0.0
      %1674 = vmatpush1.msra.mxu0 0.0
      %1675 = vmatprep.subr.mxu0 0.0
      %1676 = vmatpush1.msra.mxu0 0.0
      %1677 = vmatprep.subr.mxu0 0.0
      %1678 = vmatpush1.msra.mxu0 0.0
      %1679 = vmatprep.subr.mxu0 0.0
      %1680 = vmatpush1.msra.mxu0 0.0
      %1681 = vmatprep.subr.mxu0 0.0
      %1682 = vmatpush1.msra.mxu0 0.0
      %1683 = vmatprep.subr.mxu0 0.0
      %1684 = vmatpush1.msra.mxu0 0.0
      %1685 = vmatprep.subr.mxu0 0.0
      %1686 = vmatpush1.msra.mxu0 0.0
      %1687 = vmatprep.subr.mxu0 0.0
      %1688 = vmatpush1.msra.mxu0 0.0
      %1689 = vmatprep.subr.mxu0 0.0
      %1690 = vmatpush1.msra.mxu0 0.0
      %1691 = vmatprep.subr.mxu0 0.0
      %1692 = vmatpush1.msra.mxu0 0.0
      %1693 = vmatprep.subr.mxu0 0.0
      %1694 = vmatpush1.msra.mxu0 0.0
      %1695 = vmatprep.subr.mxu0 0.0
      %1696 = vmatpush1.msra.mxu0 0.0
      %1697 = vmatprep.mubr.f32.mxu0 0.0
      %1698 = vmatmul.mubr.f32.gmra.mrb[0].mxu0 %v1628
      %v1699 = vpop.f32.mrb[0].mxu0
      %v1700 = vadd.f32 0.0, %v1699
      %v1701 = vpop.f32.mrb[0].mxu0
      %1702 = vdwg.mxu0
      %v1704 = vsel %vm469, %v1626, 0
      %1706 = vmatprep.subr.mxu0 0.0
      %1707 = vmatpush1.msra.mxu0 %v1704
      %1708 = vmatprep.subr.mxu0 0.0
      %1709 = vmatpush1.msra.mxu0 0.0
      %1710 = vmatprep.subr.mxu0 0.0
      %1711 = vmatpush1.msra.mxu0 0.0
      %1712 = vmatprep.subr.mxu0 0.0
      %1713 = vmatpush1.msra.mxu0 0.0
      %1714 = vmatprep.subr.mxu0 0.0
      %1715 = vmatpush1.msra.mxu0 0.0
      %1716 = vmatprep.subr.mxu0 0.0
      %1717 = vmatpush1.msra.mxu0 0.0
      %1718 = vmatprep.subr.mxu0 0.0
      %1719 = vmatpush1.msra.mxu0 0.0
      %1720 = vmatprep.subr.mxu0 0.0
      %1721 = vmatpush1.msra.mxu0 0.0
      %1722 = vmatprep.subr.mxu0 0.0
      %1723 = vmatpush1.msra.mxu0 0.0
      %1724 = vmatprep.subr.mxu0 0.0
      %1725 = vmatpush1.msra.mxu0 0.0
      %1726 = vmatprep.subr.mxu0 0.0
      %1727 = vmatpush1.msra.mxu0 0.0
      %1728 = vmatprep.subr.mxu0 0.0
      %1729 = vmatpush1.msra.mxu0 0.0
      %1730 = vmatprep.subr.mxu0 0.0
      %1731 = vmatpush1.msra.mxu0 0.0
      %1732 = vmatprep.subr.mxu0 0.0
      %1733 = vmatpush1.msra.mxu0 0.0
      %1734 = vmatprep.subr.mxu0 0.0
      %1735 = vmatpush1.msra.mxu0 0.0
      %1736 = vmatprep.subr.mxu0 0.0
      %1737 = vmatpush1.msra.mxu0 0.0
      %1738 = vmatprep.subr.mxu0 0.0
      %1739 = vmatpush1.msra.mxu0 0.0
      %1740 = vmatprep.subr.mxu0 0.0
      %1741 = vmatpush1.msra.mxu0 0.0
      %1742 = vmatprep.subr.mxu0 0.0
      %1743 = vmatpush1.msra.mxu0 0.0
      %1744 = vmatprep.subr.mxu0 0.0
      %1745 = vmatpush1.msra.mxu0 0.0
      %1746 = vmatprep.subr.mxu0 0.0
      %1747 = vmatpush1.msra.mxu0 0.0
      %1748 = vmatprep.subr.mxu0 0.0
      %1749 = vmatpush1.msra.mxu0 0.0
      %1750 = vmatprep.subr.mxu0 0.0
      %1751 = vmatpush1.msra.mxu0 0.0
      %1752 = vmatprep.subr.mxu0 0.0
      %1753 = vmatpush1.msra.mxu0 0.0
      %1754 = vmatprep.subr.mxu0 0.0
      %1755 = vmatpush1.msra.mxu0 0.0
      %1756 = vmatprep.subr.mxu0 0.0
      %1757 = vmatpush1.msra.mxu0 0.0
      %1758 = vmatprep.subr.mxu0 0.0
      %1759 = vmatpush1.msra.mxu0 0.0
      %1760 = vmatprep.subr.mxu0 0.0
      %1761 = vmatpush1.msra.mxu0 0.0
      %1762 = vmatprep.subr.mxu0 0.0
      %1763 = vmatpush1.msra.mxu0 0.0
      %1764 = vmatprep.subr.mxu0 0.0
      %1765 = vmatpush1.msra.mxu0 0.0
      %1766 = vmatprep.subr.mxu0 0.0
      %1767 = vmatpush1.msra.mxu0 0.0
      %1768 = vmatprep.subr.mxu0 0.0
      %1769 = vmatpush1.msra.mxu0 0.0
      %1770 = vmatprep.mubr.f32.mxu0 0.0
      %1771 = vmatmul.mubr.f32.gmra.mrb[0].mxu0 %v1628
      %v1772 = vpop.f32.mrb[0].mxu0
      %v1773 = vadd.f32 0.0, %v1772
      %v1774 = vpop.f32.mrb[0].mxu0
      %1775 = vdwg.mxu0
      %1777 = vrot.lane.b32.xlu0 %v1773, 1
      %v1778 = vpop.permute.xlu0 %1777
      %v1780 = vmul.f32 %v1411, %v1778
      %1782 = vrot.lane.b32.xlu0 %v1780, 127
      %v1783 = vpop.permute.xlu0 %1782
      %v1785 = vmul.f32 %v1700, %v1783
      %1787 = vrot.lane.b32.xlu0 %v1785, 2
      %v1788 = vpop.permute.xlu0 %1787
      %v1790 = vsub.f32 %v1411, %v1788
      %1791 = vset.pattern.permute.xlu0 1
      %1792 = vperm.xlu0 %1791, %v1780
      %v1793 = vpop.permute.xlu0 %1792
      %v1795 = vmul.f32 %v1461, %v1793
      %v1796 = vmul.f32 %v1463, %v1793
      %1798 = vset.pattern.permute.xlu0 2
      %1799 = vperm.xlu0 %1798, %v1790
      %v1800 = vpop.permute.xlu0 %1799
      %v1802 = vadd.f32 %v1795, %v1800
      %v1803 = vadd.f32 %v1796, %v1800
      %v1804 = vmax.f32 %v1802, 0.0
      %v1805 = vmax.f32 %v1803, 0.0
      %1806 = vst [vmem:[%s251] sm:$0xff] %v1804
      %1807 = vst [vmem:[%s251 + $0x8] sm:$0xff] %v1805
      %p1808 = scmp.lt.s32.totalorder %s17, 1
      %s1809 = scalar_select %p1808, %s17, 1
      %s1810 = smul.addr %s1809, 2
      %s1811 = smul.addr %s1810, 8
      %s1812 = scalar_lea.vmem %s6, %s1811
      // Predicated region
      $region45: #{res_block_forward.1} parent=43 // pred_check
        %p1813 = pneg %p166
      $region46: #{res_block_forward.1} parent=43 // pred_check_branch
        %1815 = sbr.rel (%p1813) target = $region48
      $region47: #{res_block_forward.1} parent=43 // pred_region
        _
      $region48: #{res_block_forward.1} parent=43 // pred_fallthru
        _
    $region44: #{res_block_forward.1} parent=5 // pred_fallthru
      _
    %p1816 = scmp.le.s32.totalorder 2, %s12
    // Predicated region
    $region49: #{res_block_forward.1} parent=5 // pred_check
      %p1817 = pneg %p1816
    $region50: #{res_block_forward.1} parent=5 // pred_check_branch
      %1819 = sbr.rel (%p1817) target = $region52
    $region51: #{res_block_forward.1} parent=5 // pred_region
      %s1820 = ssub.s32 %s12, 2
      // Predicated region
      $region53: #{res_block_forward.1} parent=51 // pred_check
        %p1821 = pneg %p172
      $region54: #{res_block_forward.1} parent=51 // pred_check_branch
        %1823 = sbr.rel (%p1821) target = $region56
      $region55: #{res_block_forward.1} parent=51 // pred_region
        %p1824 = scmp.lt.s32.totalorder %s18, 1
        %s1825 = scalar_select %p1824, %s18, 1
        %s1826 = smul.addr %s1825, 2
        %s1827 = smul.addr %s1826, 8
        %s1828 = scalar_lea.vmem %s6, %s1827
      $region56: #{res_block_forward.1} parent=51 // pred_fallthru
        _
    $region52: #{res_block_forward.1} parent=5 // pred_fallthru
      _
  $region6: #{res_block_forward.1} parent=0 // loop_footer
    %s16 = sadd.s32 1, %s12
  $region7: #{res_block_forward.1} parent=0 // loop_footer_branch
    %11 = sbr.rel target = $region3
  $region8: #{res_block_forward.1} parent=0 // loop_exit
    _

</llo_original>
